<compile_context>
chip_gen: v7x
topology: tpu7x:2x2x1
jax: 0.10.0
libtpu: 0.0.40
codegen_flags: <defaults>
</compile_context>

<pallas_src>
import functools

import jax
import jax.numpy as jnp
from jax import lax
from jax.experimental import pallas as pl
from jax.experimental.pallas import tpu as pltpu

EPS = 1e-5  # PyTorch BatchNorm2d default eps
_VMEM_LIMIT = 32 * 1024 * 1024          # safe on v5e/v6e/v7x
_WEIGHT_TILE_BYTES = 12 * 1024 * 1024   # per-buffer bf16 budget for one K tile


def _round_up(x, m):
    return ((x + m - 1) // m) * m


# ---------------------------------------------------------------------------
# Pallas kernels
# ---------------------------------------------------------------------------
def _mm_bn_relu_kernel(*refs, add_residual):
    """o += A @ W; on last K-step: + bias, BatchNorm(batch stats), ReLU [+ res].

    Grid = (cout_tiles, k_tiles); the output block index is constant along the
    K axis, so o_ref stays resident and doubles as the f32 accumulator.
    """
    if add_residual:
        a_ref, w_ref, b_ref, g_ref, be_ref, r_ref, o_ref = refs
    else:
        a_ref, w_ref, b_ref, g_ref, be_ref, o_ref = refs
        r_ref = None
    k = pl.program_id(1)

    @pl.when(k == 0)
    def _():
        o_ref[...] = jnp.zeros_like(o_ref)

    o_ref[...] += jnp.dot(a_ref[...], w_ref[...],
                          preferred_element_type=jnp.float32)

    @pl.when(k == pl.num_programs(1) - 1)
    def _():
        y = o_ref[...] + b_ref[...]                              # (M, tn) + (1, tn)
        # NOTE: BN stats require the M block to cover the full N*H*W extent;
        # only the Cout axis is safe to tile (it is, above).
        mean = jnp.mean(y, axis=0, keepdims=True)
        var = jnp.mean(jnp.square(y - mean), axis=0, keepdims=True)  # biased var
        yhat = (y - mean) * lax.rsqrt(var + EPS)
        out = jnp.maximum(g_ref[...] * yhat + be_ref[...], 0.0)
        if add_residual:
            out = out + r_ref[...]
        o_ref[...] = out


def _choose_k_tile(K, tn, M):
    """Largest K tile whose bf16 A/W blocks stay inside the per-buffer budget,
    preferring an exact divisor of K (no padding copies)."""
    cap_w = (_WEIGHT_TILE_BYTES // (tn * 2)) // 128 * 128
    cap_a = (_WEIGHT_TILE_BYTES // (max(M, 1) * 2)) // 128 * 128
    cap = max(128, min(cap_w, cap_a))
    if K <= cap:
        return K, K                       # single step, no padding
    t = cap
    while t >= 128:
        if K % t == 0:
            return t, K                   # exact divisor, no padding
        t -= 128
    tk = cap
    return tk, _round_up(K, tk)           # fallback: pad K


def matmul_bn_relu(a, w, bias, gamma, beta, residual=None):
    """a: (M, K), w: (K, Cout).  Returns relu(BN(a @ w + bias)) [+ residual]
    of shape (M, Cout).  Matmul runs in bf16 on the MXU, accumulates in f32."""
    M, K = a.shape
    _, cout = w.shape

    # Lane-dense output: pad Cout up to a multiple of 128, slice afterwards.
    cout_p = _round_up(cout, 128)
    # Cout tile: 256-wide for the big layers (>=512) so v7x's two TensorCores
    # both get work; 128-wide otherwise.
    tn = 256 if cout_p >= 512 else min(cout_p, 128)
    tk, kp = _choose_k_tile(K, tn, M)

    if kp != K:
        a = jnp.pad(a, ((0, 0), (0, kp - K)))
        w = jnp.pad(w, ((0, kp - K), (0, 0)))
    if cout_p != cout:
        w = jnp.pad(w, ((0, 0), (0, cout_p - cout)))
        bias = jnp.pad(bias, (0, cout_p - cout))
        gamma = jnp.pad(gamma, (0, cout_p - cout))
        beta = jnp.pad(beta, (0, cout_p - cout))
        if residual is not None:
            residual = jnp.pad(residual, ((0, 0), (0, cout_p - cout)))

    a = a.astype(jnp.bfloat16)
    w = w.astype(jnp.bfloat16)
    b2 = bias.reshape(1, cout_p).astype(jnp.float32)
    g2 = gamma.reshape(1, cout_p).astype(jnp.float32)
    be2 = beta.reshape(1, cout_p).astype(jnp.float32)

    ncout = cout_p // tn
    nk = kp // tk

    in_specs = [
        pl.BlockSpec((M, tk), lambda j, k: (0, k)),
        pl.BlockSpec((tk, tn), lambda j, k: (k, j)),
        pl.BlockSpec((1, tn), lambda j, k: (0, j)),
        pl.BlockSpec((1, tn), lambda j, k: (0, j)),
        pl.BlockSpec((1, tn), lambda j, k: (0, j)),
    ]
    args = [a, w, b2, g2, be2]
    add_residual = residual is not None
    if add_residual:
        in_specs.append(pl.BlockSpec((M, tn), lambda j, k: (0, j)))
        args.append(residual.astype(jnp.float32))

    out = pl.pallas_call(
        functools.partial(_mm_bn_relu_kernel, add_residual=add_residual),
        out_shape=jax.ShapeDtypeStruct((M, cout_p), jnp.float32),
        grid_spec=pltpu.PrefetchScalarGridSpec(
            num_scalar_prefetch=0,
            grid=(ncout, nk),
            in_specs=in_specs,
            out_specs=pl.BlockSpec((M, tn), lambda j, k: (0, j)),
        ),
        compiler_params=pltpu.CompilerParams(
            dimension_semantics=("parallel", "arbitrary"),
            vmem_limit_bytes=_VMEM_LIMIT,
        ),
    )(*args)

    return out[:, :cout] if cout_p != cout else out


def _maxpool_kernel(p_ref, o_ref):
    o_ref[...] = jnp.max(p_ref[...], axis=0)


def maxpool_3x3_s2(x):
    """MaxPool2d(kernel_size=3, stride=2, padding=0) on NHWC input."""
    # TODO(synk): fold this pool into the conv1 epilogue (or do the 9 strided
    # window reads in-kernel) to avoid the 9x tap materialization; the tensor
    # here is tiny so the wrapper-side extraction is kept for robustness.
    n, h, w, c = x.shape
    ho = (h - 3) // 2 + 1
    wo = (w - 3) // 2 + 1
    pats = []
    for a in range(3):
        for b in range(3):
            pats.append(
                x[:, a:a + 2 * (ho - 1) + 1:2, b:b + 2 * (wo - 1) + 1:2, :]
                .reshape(n * ho * wo, c)
            )
    p = jnp.stack(pats, axis=0)  # (9, M, C)
    out = pl.pallas_call(
        _maxpool_kernel, out_shape=jax.ShapeDtypeStruct((n * ho * wo, c), x.dtype)
    )(p)
    return out.reshape(n, ho, wo, c)


# ---------------------------------------------------------------------------
# Conv / ConvTranspose glue (im2col) feeding the Pallas matmul kernel
# ---------------------------------------------------------------------------
def _im2col(x, kh, kw, stride):
    # TODO(synk): fuse the patch extraction into the kernel (grid axis over the
    # kh*kw taps with window index_maps) to avoid the 9x HBM duplication for
    # the big 3x3 convs; done in the wrapper (in bf16) for now.
    n, h, w, c = x.shape
    ho = (h - kh) // stride + 1
    wo = (w - kw) // stride + 1
    pats = []
    for a in range(kh):
        for b in range(kw):
            pats.append(
                x[:, a:a + stride * (ho - 1) + 1:stride,
                  b:b + stride * (wo - 1) + 1:stride, :]
            )
    p = jnp.stack(pats, axis=3)                       # (N, Ho, Wo, kh*kw, C)
    return p.reshape(n * ho * wo, kh * kw * c), (n, ho, wo)


def conv_bn_relu(x, wt, bias, gamma, beta, *, stride=1, padding=0, residual=None):
    """Conv2d + BatchNorm2d(train) + ReLU [+ fused residual add] on NHWC x.

    wt: PyTorch-layout weight (Cout, Cin, kh, kw).
    residual (optional): NHWC tensor with the output's shape, added AFTER the
    ReLU (matches `out = x + conv_block(x)` / `out = out + resize(...)`)."""
    cout, cin, kh, kw = wt.shape
    x = x.astype(jnp.bfloat16)
    if padding:
        x = jnp.pad(x, ((0, 0), (padding, padding), (padding, padding), (0, 0)))
    a, (n, ho, wo) = _im2col(x, kh, kw, stride)
    wm = jnp.transpose(wt, (2, 3, 1, 0)).reshape(kh * kw * cin, cout)
    r2 = None
    if residual is not None:
        r2 = residual.reshape(n * ho * wo, cout).astype(jnp.float32)
    y = matmul_bn_relu(a, wm, bias, gamma, beta, residual=r2)
    return y.reshape(n, ho, wo, cout)


def convT_bn_relu(x, wt, bias, gamma, beta, *, stride):
    """ConvTranspose2d(padding=0) + BatchNorm2d(train) + ReLU on NHWC x.

    wt: PyTorch-layout weight (Cin, Cout, kh, kw)."""
    # TODO(synk): sub-pixel decomposition would avoid the zero-dilated input;
    # these layers have Cin=Cout=n_classes (tiny), so the waste is negligible.
    cin, cout, kh, kw = wt.shape
    n, h, w, c = x.shape
    x = x.astype(jnp.bfloat16)
    hd = (h - 1) * stride + 1
    wd = (w - 1) * stride + 1
    xd = jnp.zeros((n, hd, wd, c), x.dtype).at[:, ::stride, ::stride, :].set(x)
    xd = jnp.pad(xd, ((0, 0), (kh - 1, kh - 1), (kw - 1, kw - 1), (0, 0)))
    weq = jnp.transpose(jnp.flip(wt, axis=(2, 3)), (1, 0, 2, 3))  # (Cout, Cin, kh, kw)
    return conv_bn_relu(xd, weq, bias, gamma, beta, stride=1, padding=0)


# ---------------------------------------------------------------------------
# Parameter construction (deterministic, synthetic)
# ---------------------------------------------------------------------------
class ParamGen:
    def __init__(self, seed=0):
        self.key = jax.random.PRNGKey(seed)

    def _next(self):
        self.key, sub = jax.random.split(self.key)
        return sub

    def conv(self, cout, cin, k):
        w = jax.random.normal(self._next(), (cout, cin, k, k), jnp.float32) * 0.05
        b = jax.random.normal(self._next(), (cout,), jnp.float32) * 0.05
        return (w, b, jnp.ones((cout,), jnp.float32), jnp.zeros((cout,), jnp.float32))

    def convT(self, cin, cout, k):
        w = jax.random.normal(self._next(), (cin, cout, k, k), jnp.float32) * 0.05
        b = jax.random.normal(self._next(), (cout,), jnp.float32) * 0.05
        return (w, b, jnp.ones((cout,), jnp.float32), jnp.zeros((cout,), jnp.float32))


def make_resblock(pg, indim, outdim, downsample):
    d = {}
    d["c1"] = pg.conv(outdim, indim, 3 if downsample else 1)
    d["c2"] = pg.conv(outdim, outdim, 3)
    d["c3"] = pg.conv(outdim, outdim, 1)
    if indim != outdim:
        d["res"] = pg.conv(outdim, indim, 3 if downsample else 1)
    return (d, indim, outdim, downsample)


def init_fcrn_params(in_ch, n_classes, n_blocks, seed=0):
    pg = ParamGen(seed)
    p = {"conv1": pg.conv(64, in_ch, 7)}
    n_rep = n_blocks // 3 - 1
    p["resblocks1"] = [make_resblock(pg, 64, 256, False)] + \
        [make_resblock(pg, 256, 256, False) for _ in range(n_rep)]
    p["resblocks2"] = [make_resblock(pg, 256, 512, True)] + \
        [make_resblock(pg, 512, 512, False) for _ in range(n_rep)]
    p["resblocks3"] = [make_resblock(pg, 512, 1024, True)] + \
        [make_resblock(pg, 1024, 1024, False) for _ in range(n_rep)]
    p["reduction"] = pg.conv(n_classes, 1024, 1)
    p["upscale1"] = pg.convT(n_classes, n_classes, 3)
    p["upscale2"] = pg.convT(n_classes, n_classes, 3)
    p["upscale3"] = pg.convT(n_classes, n_classes, 3)
    p["resize2"] = pg.conv(2, 512, 1)
    p["resize1"] = pg.conv(2, 256, 1)
    return p


# ---------------------------------------------------------------------------
# Forward pass
# ---------------------------------------------------------------------------
def resnet_block_fwd(x, blk):
    prm, indim, outdim, downsample = blk
    h = conv_bn_relu(x, *prm["c1"], stride=2 if downsample else 1, padding=0)
    h = conv_bn_relu(h, *prm["c2"], stride=1, padding=1)
    if indim != outdim:
        xr = conv_bn_relu(x, *prm["res"], stride=2 if downsample else 1, padding=0)
    else:
        xr = x
    # Skip-connection add fused into the c3 matmul epilogue.
    return conv_bn_relu(h, *prm["c3"], stride=1, padding=0, residual=xr)


def fcrn_forward(x_nchw, params):
    x = jnp.transpose(x_nchw, (0, 2, 3, 1)).astype(jnp.float32)   # NCHW -> NHWC

    out = conv_bn_relu(x, *params["conv1"], stride=2, padding=0)
    out = maxpool_3x3_s2(out)

    for blk in params["resblocks1"]:
        out = resnet_block_fwd(out, blk)
    out_1 = out
    for blk in params["resblocks2"]:
        out = resnet_block_fwd(out, blk)
    out_2 = out
    for blk in params["resblocks3"]:
        out = resnet_block_fwd(out, blk)

    out = conv_bn_relu(out, *params["reduction"], stride=1, padding=0)
    out = convT_bn_relu(out, *params["upscale1"], stride=2)
    # ReflectionPad2d((0, 1, 0, 0)): pad W-right by 1
    out = jnp.pad(out, ((0, 0), (0, 0), (0, 1), (0, 0)), mode="reflect")
    # out = out + resize2(out_2), fused into the resize2 epilogue
    out = conv_bn_relu(out_2, *params["resize2"], stride=1, padding=0, residual=out)
    out = convT_bn_relu(out, *params["upscale2"], stride=2)
    # out = out + resize1(out_1), fused into the resize1 epilogue
    out = conv_bn_relu(out_1, *params["resize1"], stride=1, padding=0, residual=out)
    # ReflectionPad2d((1, 2, 1, 2)): W(left=1,right=2), H(top=1,bottom=2)
    out = jnp.pad(out, ((0, 0), (1, 2), (1, 2), (0, 0)), mode="reflect")
    out = convT_bn_relu(out, *params["upscale3"], stride=4)
    out = out[:, 1:-2, 1:-2, :]

    return jnp.transpose(out, (0, 3, 1, 2))                        # NHWC -> NCHW


# ---------------------------------------------------------------------------
if __name__ == "__main__":
    # Shapes: FCRN's residual adds + reflection pads only line up when the
    # downsampled feature maps have specific parities; H=35, W=43 satisfies them.
    in_ch, n_classes, n_blocks = 3, 2, 3
    x = jax.random.normal(jax.random.PRNGKey(0), (2, in_ch, 35, 43), jnp.float32)

    params = init_fcrn_params(in_ch, n_classes, n_blocks, seed=0)
    out = fcrn_forward(x, params)
    out = jax.block_until_ready(out)

    assert out.shape == (2, n_classes, 36, 44), out.shape
    assert bool(jnp.all(jnp.isfinite(out)))
    print("KERNEL_OK")
</pallas_src>

<mosaic_0001>
module attributes {stable_mosaic.version = 11 : i64} {
  func.func @_mm_bn_relu_kernel(%arg0: i32, %arg1: i32, %arg2: memref<570x147xbf16, #tpu.memory_space<vmem>>, %arg3: memref<147x128xbf16, #tpu.memory_space<vmem>>, %arg4: memref<1x128xf32, #tpu.memory_space<vmem>>, %arg5: memref<1x128xf32, #tpu.memory_space<vmem>>, %arg6: memref<1x128xf32, #tpu.memory_space<vmem>>, %arg7: memref<570x128xf32, #tpu.memory_space<vmem>>) attributes {dimension_semantics = [#tpu.dimension_semantics<parallel>, #tpu.dimension_semantics<arbitrary>], iteration_bounds = array<i64: 1, 1>, scalar_prefetch = 0 : i64, scratch_operands = 0 : i64, tpu.core_type = #tpu.core_type<tc>, window_params = [{transform_indices = @transform_0, window_bounds = array<i64: 570, 147>}, {transform_indices = @transform_1, window_bounds = array<i64: 147, 128>}, {transform_indices = @transform_2, window_bounds = array<i64: 1, 128>}, {transform_indices = @transform_3, window_bounds = array<i64: 1, 128>}, {transform_indices = @transform_4, window_bounds = array<i64: 1, 128>}, {transform_indices = @transform_5, window_bounds = array<i64: 570, 128>}]} {
    %c0_i32 = arith.constant 0 : i32
    %0 = arith.cmpi eq, %arg1, %c0_i32 : i32
    %1 = arith.extui %0 : i1 to i32
    %c0_i32_0 = arith.constant 0 : i32
    %2 = arith.cmpi ne, %1, %c0_i32_0 : i32
    scf.if %2 {
      %cst_10 = arith.constant 0.000000e+00 : f32
      %12 = vector.broadcast %cst_10 : f32 to vector<570x128xf32>
      %c0_11 = arith.constant 0 : index
      %c0_12 = arith.constant 0 : index
      %13 = vector.load %arg7[%c0_11, %c0_12] : memref<570x128xf32, #tpu.memory_space<vmem>>, vector<570x128xf32>
      tpu.vector_store %arg7[%c0_11, %c0_12], %12 {strides = array<i32>} : memref<570x128xf32, #tpu.memory_space<vmem>>, vector<570x128xf32>,
    } else {
    }
    %c0 = arith.constant 0 : index
    %c0_1 = arith.constant 0 : index
    %3 = vector.load %arg7[%c0, %c0_1] : memref<570x128xf32, #tpu.memory_space<vmem>>, vector<570x128xf32>
    %c0_2 = arith.constant 0 : index
    %c0_3 = arith.constant 0 : index
    %4 = vector.load %arg2[%c0_2, %c0_3] : memref<570x147xbf16, #tpu.memory_space<vmem>>, vector<570x147xbf16>
    %c0_4 = arith.constant 0 : index
    %c0_5 = arith.constant 0 : index
    %5 = vector.load %arg3[%c0_4, %c0_5] : memref<147x128xbf16, #tpu.memory_space<vmem>>, vector<147x128xbf16>
    %cst = arith.constant dense<0.000000e+00> : vector<570x128xf32>
    %6 = tpu.matmul %4, %5, %cst {dimension_numbers = #tpu.dot_dimension_numbers<[1], [0], [0], [1], [0, 0, 1, 1], [], []>} : vector<570x147xbf16>, vector<147x128xbf16>, vector<570x128xf32> -> vector<570x128xf32>
    %7 = arith.addf %3, %6 : vector<570x128xf32>
    %c0_6 = arith.constant 0 : index
    %c0_7 = arith.constant 0 : index
    %8 = vector.load %arg7[%c0_6, %c0_7] : memref<570x128xf32, #tpu.memory_space<vmem>>, vector<570x128xf32>
    tpu.vector_store %arg7[%c0_6, %c0_7], %7 {strides = array<i32>} : memref<570x128xf32, #tpu.memory_space<vmem>>, vector<570x128xf32>,
    %c0_i32_8 = arith.constant 0 : i32
    %9 = arith.cmpi eq, %arg1, %c0_i32_8 : i32
    %10 = arith.extui %9 : i1 to i32
    %c0_i32_9 = arith.constant 0 : i32
    %11 = arith.cmpi ne, %10, %c0_i32_9 : i32
    scf.if %11 {
      %c0_10 = arith.constant 0 : index
      %c0_11 = arith.constant 0 : index
      %12 = vector.load %arg7[%c0_10, %c0_11] : memref<570x128xf32, #tpu.memory_space<vmem>>, vector<570x128xf32>
      %c0_12 = arith.constant 0 : index
      %c0_13 = arith.constant 0 : index
      %13 = vector.load %arg4[%c0_12, %c0_13] : memref<1x128xf32, #tpu.memory_space<vmem>>, vector<1x128xf32>
      %14 = vector.broadcast %13 : vector<1x128xf32> to vector<570x128xf32>
      %15 = arith.addf %12, %14 : vector<570x128xf32>
      %cst_14 = arith.constant dense<0.000000e+00> : vector<128xf32>
      %16 = vector.multi_reduction <add>, %15, %cst_14 [0] : vector<570x128xf32> to vector<128xf32>
      %17 = vector.shape_cast %16 : vector<128xf32> to vector<1x128xf32>
      %cst_15 = arith.constant 5.700000e+02 : f32
      %18 = vector.broadcast %cst_15 : f32 to vector<1x128xf32>
      %19 = arith.divf %17, %18 : vector<1x128xf32>
      %20 = vector.broadcast %19 : vector<1x128xf32> to vector<570x128xf32>
      %21 = arith.subf %15, %20 : vector<570x128xf32>
      %22 = arith.mulf %21, %21 : vector<570x128xf32>
      %cst_16 = arith.constant dense<0.000000e+00> : vector<128xf32>
      %23 = vector.multi_reduction <add>, %22, %cst_16 [0] : vector<570x128xf32> to vector<128xf32>
      %24 = vector.shape_cast %23 : vector<128xf32> to vector<1x128xf32>
      %cst_17 = arith.constant 5.700000e+02 : f32
      %25 = vector.broadcast %cst_17 : f32 to vector<1x128xf32>
      %26 = arith.divf %24, %25 : vector<1x128xf32>
      %27 = vector.broadcast %19 : vector<1x128xf32> to vector<570x128xf32>
      %28 = arith.subf %15, %27 : vector<570x128xf32>
      %cst_18 = arith.constant 9.99999974E-6 : f32
      %29 = vector.broadcast %cst_18 : f32 to vector<1x128xf32>
      %30 = arith.addf %26, %29 : vector<1x128xf32>
      %31 = math.rsqrt %30 : vector<1x128xf32>
      %32 = vector.broadcast %31 : vector<1x128xf32> to vector<570x128xf32>
      %33 = arith.mulf %28, %32 : vector<570x128xf32>
      %c0_19 = arith.constant 0 : index
      %c0_20 = arith.constant 0 : index
      %34 = vector.load %arg5[%c0_19, %c0_20] : memref<1x128xf32, #tpu.memory_space<vmem>>, vector<1x128xf32>
      %35 = vector.broadcast %34 : vector<1x128xf32> to vector<570x128xf32>
      %36 = arith.mulf %35, %33 : vector<570x128xf32>
      %c0_21 = arith.constant 0 : index
      %c0_22 = arith.constant 0 : index
      %37 = vector.load %arg6[%c0_21, %c0_22] : memref<1x128xf32, #tpu.memory_space<vmem>>, vector<1x128xf32>
      %38 = vector.broadcast %37 : vector<1x128xf32> to vector<570x128xf32>
      %39 = arith.addf %36, %38 : vector<570x128xf32>
      %cst_23 = arith.constant 0.000000e+00 : f32
      %40 = vector.broadcast %cst_23 : f32 to vector<570x128xf32>
      %41 = arith.maximumf %39, %40 : vector<570x128xf32>
      %c0_24 = arith.constant 0 : index
      %c0_25 = arith.constant 0 : index
      %42 = vector.load %arg7[%c0_24, %c0_25] : memref<570x128xf32, #tpu.memory_space<vmem>>, vector<570x128xf32>
      tpu.vector_store %arg7[%c0_24, %c0_25], %41 {strides = array<i32>} : memref<570x128xf32, #tpu.memory_space<vmem>>, vector<570x128xf32>,
    } else {
    }
    return
  }
  func.func @transform_0(%arg0: i32, %arg1: i32) -> (i32, i32) {
    %c0_i32 = arith.constant 0 : i32
    %c0_i32_0 = arith.constant 0 : i32
    return %c0_i32, %arg1 : i32, i32
  }
  func.func @transform_1(%arg0: i32, %arg1: i32) -> (i32, i32) {
    %c0_i32 = arith.constant 0 : i32
    return %arg1, %arg0 : i32, i32
  }
  func.func @transform_2(%arg0: i32, %arg1: i32) -> (i32, i32) {
    %c0_i32 = arith.constant 0 : i32
    %c0_i32_0 = arith.constant 0 : i32
    return %c0_i32, %arg0 : i32, i32
  }
  func.func @transform_3(%arg0: i32, %arg1: i32) -> (i32, i32) {
    %c0_i32 = arith.constant 0 : i32
    %c0_i32_0 = arith.constant 0 : i32
    return %c0_i32, %arg0 : i32, i32
  }
  func.func @transform_4(%arg0: i32, %arg1: i32) -> (i32, i32) {
    %c0_i32 = arith.constant 0 : i32
    %c0_i32_0 = arith.constant 0 : i32
    return %c0_i32, %arg0 : i32, i32
  }
  func.func @transform_5(%arg0: i32, %arg1: i32) -> (i32, i32) {
    %c0_i32 = arith.constant 0 : i32
    %c0_i32_0 = arith.constant 0 : i32
    return %c0_i32, %arg0 : i32, i32
  }
}

</mosaic_0001>

<llo_original>
// kernel: tpu_custom_call.1
$region0: #{tpu_custom_call.1}
  #allocation0 [shape = 'u32[]', space=smem, size = 0x4, offset = 0x4, fixed_abs, tag = 'smem constant byte address 0x4 - core index']
  #allocation1 [shape = 'u32[144,128]{1,0:T(1,128)}', space=vmem, size = 0x12000, scoped, tag = 'internal scratch']
  %s0 = inlined_call_operand.vmem [shape: bf16[570,147], index: 0, kind: input, shape index: {}]
  %s1 = inlined_call_operand.vmem [shape: bf16[147,128], index: 1, kind: input, shape index: {}]
  %s2 = inlined_call_operand.vmem [shape: f32[1,128], index: 2, kind: input, shape index: {}]
  %s3 = inlined_call_operand.vmem [shape: f32[1,128], index: 3, kind: input, shape index: {}]
  %s4 = inlined_call_operand.vmem [shape: f32[1,128], index: 4, kind: input, shape index: {}]
  %s5 = inlined_call_operand.hbm [shape: f32[570,128], index: 5, kind: output, shape index: {}]
  %s6 = sld [smem:[#allocation0]]
  $region38: #{tpu_custom_call.1} parent=0
    _
  %s8 = ssub.s32 1, %s6
  %s9 = scalar_select 0, %s8, %s6
  $region1: #{tpu_custom_call.1} parent=0
    #allocation2 [shape = 'u8[294912]{0}', space=vmem, size = 0x48000, scoped, tag = 'output window, operand 0, single buffered']
    #allocation3 [shape = 's32[1]{0}', space=sflag, size = 0x4, scoped, tag = 'scoped memory for tpu_custom_call.1']
    %10 = vsyncpa [#allocation3], 0
    // Predicated region
    $region2: #{tpu_custom_call.1} parent=1 // pred_check
      _
    $region3: #{tpu_custom_call.1} parent=1 // pred_check_branch
      %12 = sbr.rel (0) target = $region5
    $region4: #{tpu_custom_call.1} parent=1 // pred_region
      _
    $region5: #{tpu_custom_call.1} parent=1 // pred_fallthru
      _
    // Predicated region
    $region6: #{tpu_custom_call.1} parent=1 // pred_check
      _
    $region7: #{tpu_custom_call.1} parent=1 // pred_check_branch
      %14 = sbr.rel (0) target = $region9
    $region8: #{tpu_custom_call.1} parent=1 // pred_region
      _
    $region9: #{tpu_custom_call.1} parent=1 // pred_fallthru
      _
    // Predicated region
    $region10: #{tpu_custom_call.1} parent=1 // pred_check
      _
    $region11: #{tpu_custom_call.1} parent=1 // pred_check_branch
      %16 = sbr.rel (0) target = $region13
    $region12: #{tpu_custom_call.1} parent=1 // pred_region
      _
    $region13: #{tpu_custom_call.1} parent=1 // pred_fallthru
      _
    // Predicated region
    $region14: #{tpu_custom_call.1} parent=1 // pred_check
      _
    $region15: #{tpu_custom_call.1} parent=1 // pred_check_branch
      %18 = sbr.rel (0) target = $region17
    $region16: #{tpu_custom_call.1} parent=1 // pred_region
      _
    $region17: #{tpu_custom_call.1} parent=1 // pred_fallthru
      _
    // Predicated region
    $region18: #{tpu_custom_call.1} parent=1 // pred_check
      _
    $region19: #{tpu_custom_call.1} parent=1 // pred_check_branch
      %20 = sbr.rel (0) target = $region21
    $region20: #{tpu_custom_call.1} parent=1 // pred_region
      _
    $region21: #{tpu_custom_call.1} parent=1 // pred_fallthru
      _
    %p22 = scmp.eq.s32.totalorder 0, 0
    // Predicated region
    $region22: #{tpu_custom_call.1} parent=1 // pred_check
      %p23 = pneg %p22
    $region23: #{tpu_custom_call.1} parent=1 // pred_check_branch
      %25 = sbr.rel (%p23) target = $region25
    $region24: #{tpu_custom_call.1} parent=1 // pred_region
      %26 = vst [vmem:[#allocation2] sm:$0xff] 0.0
      %27 = vst [vmem:[#allocation2 + $0x8] sm:$0xff] 0.0
      %28 = vst [vmem:[#allocation2 + $0x10] sm:$0xff] 0.0
      %29 = vst [vmem:[#allocation2 + $0x18] sm:$0xff] 0.0
      %30 = vst [vmem:[#allocation2 + $0x20] sm:$0xff] 0.0
      %31 = vst [vmem:[#allocation2 + $0x28] sm:$0xff] 0.0
      %32 = vst [vmem:[#allocation2 + $0x30] sm:$0xff] 0.0
      %33 = vst [vmem:[#allocation2 + $0x38] sm:$0xff] 0.0
      %34 = vst [vmem:[#allocation2 + $0x40] sm:$0xff] 0.0
      %35 = vst [vmem:[#allocation2 + $0x48] sm:$0xff] 0.0
      %36 = vst [vmem:[#allocation2 + $0x50] sm:$0xff] 0.0
      %37 = vst [vmem:[#allocation2 + $0x58] sm:$0xff] 0.0
      %38 = vst [vmem:[#allocation2 + $0x60] sm:$0xff] 0.0
      %39 = vst [vmem:[#allocation2 + $0x68] sm:$0xff] 0.0
      %40 = vst [vmem:[#allocation2 + $0x70] sm:$0xff] 0.0
      %41 = vst [vmem:[#allocation2 + $0x78] sm:$0xff] 0.0
      %42 = vst [vmem:[#allocation2 + $0x80] sm:$0xff] 0.0
      %43 = vst [vmem:[#allocation2 + $0x88] sm:$0xff] 0.0
      %44 = vst [vmem:[#allocation2 + $0x90] sm:$0xff] 0.0
      %45 = vst [vmem:[#allocation2 + $0x98] sm:$0xff] 0.0
      %46 = vst [vmem:[#allocation2 + $0xa0] sm:$0xff] 0.0
      %47 = vst [vmem:[#allocation2 + $0xa8] sm:$0xff] 0.0
      %48 = vst [vmem:[#allocation2 + $0xb0] sm:$0xff] 0.0
      %49 = vst [vmem:[#allocation2 + $0xb8] sm:$0xff] 0.0
      %50 = vst [vmem:[#allocation2 + $0xc0] sm:$0xff] 0.0
      %51 = vst [vmem:[#allocation2 + $0xc8] sm:$0xff] 0.0
      %52 = vst [vmem:[#allocation2 + $0xd0] sm:$0xff] 0.0
      %53 = vst [vmem:[#allocation2 + $0xd8] sm:$0xff] 0.0
      %54 = vst [vmem:[#allocation2 + $0xe0] sm:$0xff] 0.0
      %55 = vst [vmem:[#allocation2 + $0xe8] sm:$0xff] 0.0
      %56 = vst [vmem:[#allocation2 + $0xf0] sm:$0xff] 0.0
      %57 = vst [vmem:[#allocation2 + $0xf8] sm:$0xff] 0.0
      %58 = vst [vmem:[#allocation2 + $0x100] sm:$0xff] 0.0
      %59 = vst [vmem:[#allocation2 + $0x108] sm:$0xff] 0.0
      %60 = vst [vmem:[#allocation2 + $0x110] sm:$0xff] 0.0
      %61 = vst [vmem:[#allocation2 + $0x118] sm:$0xff] 0.0
      %62 = vst [vmem:[#allocation2 + $0x120] sm:$0xff] 0.0
      %63 = vst [vmem:[#allocation2 + $0x128] sm:$0xff] 0.0
      %64 = vst [vmem:[#allocation2 + $0x130] sm:$0xff] 0.0
      %65 = vst [vmem:[#allocation2 + $0x138] sm:$0xff] 0.0
      %66 = vst [vmem:[#allocation2 + $0x140] sm:$0xff] 0.0
      %67 = vst [vmem:[#allocation2 + $0x148] sm:$0xff] 0.0
      %68 = vst [vmem:[#allocation2 + $0x150] sm:$0xff] 0.0
      %69 = vst [vmem:[#allocation2 + $0x158] sm:$0xff] 0.0
      %70 = vst [vmem:[#allocation2 + $0x160] sm:$0xff] 0.0
      %71 = vst [vmem:[#allocation2 + $0x168] sm:$0xff] 0.0
      %72 = vst [vmem:[#allocation2 + $0x170] sm:$0xff] 0.0
      %73 = vst [vmem:[#allocation2 + $0x178] sm:$0xff] 0.0
      %74 = vst [vmem:[#allocation2 + $0x180] sm:$0xff] 0.0
      %75 = vst [vmem:[#allocation2 + $0x188] sm:$0xff] 0.0
      %76 = vst [vmem:[#allocation2 + $0x190] sm:$0xff] 0.0
      %77 = vst [vmem:[#allocation2 + $0x198] sm:$0xff] 0.0
      %78 = vst [vmem:[#allocation2 + $0x1a0] sm:$0xff] 0.0
      %79 = vst [vmem:[#allocation2 + $0x1a8] sm:$0xff] 0.0
      %80 = vst [vmem:[#allocation2 + $0x1b0] sm:$0xff] 0.0
      %81 = vst [vmem:[#allocation2 + $0x1b8] sm:$0xff] 0.0
      %82 = vst [vmem:[#allocation2 + $0x1c0] sm:$0xff] 0.0
      %83 = vst [vmem:[#allocation2 + $0x1c8] sm:$0xff] 0.0
      %84 = vst [vmem:[#allocation2 + $0x1d0] sm:$0xff] 0.0
      %85 = vst [vmem:[#allocation2 + $0x1d8] sm:$0xff] 0.0
      %86 = vst [vmem:[#allocation2 + $0x1e0] sm:$0xff] 0.0
      %87 = vst [vmem:[#allocation2 + $0x1e8] sm:$0xff] 0.0
      %88 = vst [vmem:[#allocation2 + $0x1f0] sm:$0xff] 0.0
      %89 = vst [vmem:[#allocation2 + $0x1f8] sm:$0xff] 0.0
      %90 = vst [vmem:[#allocation2 + $0x200] sm:$0xff] 0.0
      %91 = vst [vmem:[#allocation2 + $0x208] sm:$0xff] 0.0
      %92 = vst [vmem:[#allocation2 + $0x210] sm:$0xff] 0.0
      %93 = vst [vmem:[#allocation2 + $0x218] sm:$0xff] 0.0
      %94 = vst [vmem:[#allocation2 + $0x220] sm:$0xff] 0.0
      %95 = vst [vmem:[#allocation2 + $0x228] sm:$0xff] 0.0
      %96 = vst [vmem:[#allocation2 + $0x230] sm:$0xff] 0.0
      %97 = vst [vmem:[#allocation2 + $0x238] sm:$0x3] 0.0
    $region25: #{tpu_custom_call.1} parent=1 // pred_fallthru
      _
    %v98 = vld [vmem:[#allocation2] sm:$0xff]
    %v99 = vld [vmem:[#allocation2 + $0x8] sm:$0xff]
    %v100 = vld [vmem:[#allocation2 + $0x10] sm:$0xff]
    %v101 = vld [vmem:[#allocation2 + $0x18] sm:$0xff]
    %v102 = vld [vmem:[#allocation2 + $0x20] sm:$0xff]
    %v103 = vld [vmem:[#allocation2 + $0x28] sm:$0xff]
    %v104 = vld [vmem:[#allocation2 + $0x30] sm:$0xff]
    %v105 = vld [vmem:[#allocation2 + $0x38] sm:$0xff]
    %v106 = vld [vmem:[#allocation2 + $0x40] sm:$0xff]
    %v107 = vld [vmem:[#allocation2 + $0x48] sm:$0xff]
    %v108 = vld [vmem:[#allocation2 + $0x50] sm:$0xff]
    %v109 = vld [vmem:[#allocation2 + $0x58] sm:$0xff]
    %v110 = vld [vmem:[#allocation2 + $0x60] sm:$0xff]
    %v111 = vld [vmem:[#allocation2 + $0x68] sm:$0xff]
    %v112 = vld [vmem:[#allocation2 + $0x70] sm:$0xff]
    %v113 = vld [vmem:[#allocation2 + $0x78] sm:$0xff]
    %v114 = vld [vmem:[#allocation2 + $0x80] sm:$0xff]
    %v115 = vld [vmem:[#allocation2 + $0x88] sm:$0xff]
    %v116 = vld [vmem:[#allocation2 + $0x90] sm:$0xff]
    %v117 = vld [vmem:[#allocation2 + $0x98] sm:$0xff]
    %v118 = vld [vmem:[#allocation2 + $0xa0] sm:$0xff]
    %v119 = vld [vmem:[#allocation2 + $0xa8] sm:$0xff]
    %v120 = vld [vmem:[#allocation2 + $0xb0] sm:$0xff]
    %v121 = vld [vmem:[#allocation2 + $0xb8] sm:$0xff]
    %v122 = vld [vmem:[#allocation2 + $0xc0] sm:$0xff]
    %v123 = vld [vmem:[#allocation2 + $0xc8] sm:$0xff]
    %v124 = vld [vmem:[#allocation2 + $0xd0] sm:$0xff]
    %v125 = vld [vmem:[#allocation2 + $0xd8] sm:$0xff]
    %v126 = vld [vmem:[#allocation2 + $0xe0] sm:$0xff]
    %v127 = vld [vmem:[#allocation2 + $0xe8] sm:$0xff]
    %v128 = vld [vmem:[#allocation2 + $0xf0] sm:$0xff]
    %v129 = vld [vmem:[#allocation2 + $0xf8] sm:$0xff]
    %v130 = vld [vmem:[#allocation2 + $0x100] sm:$0xff]
    %v131 = vld [vmem:[#allocation2 + $0x108] sm:$0xff]
    %v132 = vld [vmem:[#allocation2 + $0x110] sm:$0xff]
    %v133 = vld [vmem:[#allocation2 + $0x118] sm:$0xff]
    %v134 = vld [vmem:[#allocation2 + $0x120] sm:$0xff]
    %v135 = vld [vmem:[#allocation2 + $0x128] sm:$0xff]
    %v136 = vld [vmem:[#allocation2 + $0x130] sm:$0xff]
    %v137 = vld [vmem:[#allocation2 + $0x138] sm:$0xff]
    %v138 = vld [vmem:[#allocation2 + $0x140] sm:$0xff]
    %v139 = vld [vmem:[#allocation2 + $0x148] sm:$0xff]
    %v140 = vld [vmem:[#allocation2 + $0x150] sm:$0xff]
    %v141 = vld [vmem:[#allocation2 + $0x158] sm:$0xff]
    %v142 = vld [vmem:[#allocation2 + $0x160] sm:$0xff]
    %v143 = vld [vmem:[#allocation2 + $0x168] sm:$0xff]
    %v144 = vld [vmem:[#allocation2 + $0x170] sm:$0xff]
    %v145 = vld [vmem:[#allocation2 + $0x178] sm:$0xff]
    %v146 = vld [vmem:[#allocation2 + $0x180] sm:$0xff]
    %v147 = vld [vmem:[#allocation2 + $0x188] sm:$0xff]
    %v148 = vld [vmem:[#allocation2 + $0x190] sm:$0xff]
    %v149 = vld [vmem:[#allocation2 + $0x198] sm:$0xff]
    %v150 = vld [vmem:[#allocation2 + $0x1a0] sm:$0xff]
    %v151 = vld [vmem:[#allocation2 + $0x1a8] sm:$0xff]
    %v152 = vld [vmem:[#allocation2 + $0x1b0] sm:$0xff]
    %v153 = vld [vmem:[#allocation2 + $0x1b8] sm:$0xff]
    %v154 = vld [vmem:[#allocation2 + $0x1c0] sm:$0xff]
    %v155 = vld [vmem:[#allocation2 + $0x1c8] sm:$0xff]
    %v156 = vld [vmem:[#allocation2 + $0x1d0] sm:$0xff]
    %v157 = vld [vmem:[#allocation2 + $0x1d8] sm:$0xff]
    %v158 = vld [vmem:[#allocation2 + $0x1e0] sm:$0xff]
    %v159 = vld [vmem:[#allocation2 + $0x1e8] sm:$0xff]
    %v160 = vld [vmem:[#allocation2 + $0x1f0] sm:$0xff]
    %v161 = vld [vmem:[#allocation2 + $0x1f8] sm:$0xff]
    %v162 = vld [vmem:[#allocation2 + $0x200] sm:$0xff]
    %v163 = vld [vmem:[#allocation2 + $0x208] sm:$0xff]
    %v164 = vld [vmem:[#allocation2 + $0x210] sm:$0xff]
    %v165 = vld [vmem:[#allocation2 + $0x218] sm:$0xff]
    %v166 = vld [vmem:[#allocation2 + $0x220] sm:$0xff]
    %v167 = vld [vmem:[#allocation2 + $0x228] sm:$0xff]
    %v168 = vld [vmem:[#allocation2 + $0x230] sm:$0xff]
    %v169 = vld [vmem:[#allocation2 + $0x238] sm:$0x3]
    %v170 = vld [vmem:[%s0] sm:$0xff]
    %v171 = vld [vmem:[%s0 + $0x8] sm:$0xff]
    %v172 = vld [vmem:[%s0 + $0x10] sm:$0xff]
    %v173 = vld [vmem:[%s0 + $0x18] sm:$0xff]
    %v174 = vld [vmem:[%s0 + $0x20] sm:$0xff]
    %v175 = vld [vmem:[%s0 + $0x28] sm:$0xff]
    %v176 = vld [vmem:[%s0 + $0x30] sm:$0xff]
    %v177 = vld [vmem:[%s0 + $0x38] sm:$0xff]
    %v178 = vld [vmem:[%s0 + $0x40] sm:$0xff]
    %v179 = vld [vmem:[%s0 + $0x48] sm:$0xff]
    %v180 = vld [vmem:[%s0 + $0x50] sm:$0xff]
    %v181 = vld [vmem:[%s0 + $0x58] sm:$0xff]
    %v182 = vld [vmem:[%s0 + $0x60] sm:$0xff]
    %v183 = vld [vmem:[%s0 + $0x68] sm:$0xff]
    %v184 = vld [vmem:[%s0 + $0x70] sm:$0xff]
    %v185 = vld [vmem:[%s0 + $0x78] sm:$0xff]
    %v186 = vld [vmem:[%s0 + $0x80] sm:$0xff]
    %v187 = vld [vmem:[%s0 + $0x88] sm:$0xff]
    %v188 = vld [vmem:[%s0 + $0x90] sm:$0xff]
    %v189 = vld [vmem:[%s0 + $0x98] sm:$0xff]
    %v190 = vld [vmem:[%s0 + $0xa0] sm:$0xff]
    %v191 = vld [vmem:[%s0 + $0xa8] sm:$0xff]
    %v192 = vld [vmem:[%s0 + $0xb0] sm:$0xff]
    %v193 = vld [vmem:[%s0 + $0xb8] sm:$0xff]
    %v194 = vld [vmem:[%s0 + $0xc0] sm:$0xff]
    %v195 = vld [vmem:[%s0 + $0xc8] sm:$0xff]
    %v196 = vld [vmem:[%s0 + $0xd0] sm:$0xff]
    %v197 = vld [vmem:[%s0 + $0xd8] sm:$0xff]
    %v198 = vld [vmem:[%s0 + $0xe0] sm:$0xff]
    %v199 = vld [vmem:[%s0 + $0xe8] sm:$0xff]
    %v200 = vld [vmem:[%s0 + $0xf0] sm:$0xff]
    %v201 = vld [vmem:[%s0 + $0xf8] sm:$0xff]
    %v202 = vld [vmem:[%s0 + $0x100] sm:$0xff]
    %v203 = vld [vmem:[%s0 + $0x108] sm:$0xff]
    %v204 = vld [vmem:[%s0 + $0x110] sm:$0xff]
    %v205 = vld [vmem:[%s0 + $0x118] sm:$0xff]
    %v206 = vld [vmem:[%s0 + $0x120] sm:$0xff]
    %v207 = vld [vmem:[%s0 + $0x128] sm:$0xff]
    %v208 = vld [vmem:[%s0 + $0x130] sm:$0xff]
    %v209 = vld [vmem:[%s0 + $0x138] sm:$0xff]
    %v210 = vld [vmem:[%s0 + $0x140] sm:$0xff]
    %v211 = vld [vmem:[%s0 + $0x148] sm:$0xff]
    %v212 = vld [vmem:[%s0 + $0x150] sm:$0xff]
    %v213 = vld [vmem:[%s0 + $0x158] sm:$0xff]
    %v214 = vld [vmem:[%s0 + $0x160] sm:$0xff]
    %v215 = vld [vmem:[%s0 + $0x168] sm:$0xff]
    %v216 = vld [vmem:[%s0 + $0x170] sm:$0xff]
    %v217 = vld [vmem:[%s0 + $0x178] sm:$0xff]
    %v218 = vld [vmem:[%s0 + $0x180] sm:$0xff]
    %v219 = vld [vmem:[%s0 + $0x188] sm:$0xff]
    %v220 = vld [vmem:[%s0 + $0x190] sm:$0xff]
    %v221 = vld [vmem:[%s0 + $0x198] sm:$0xff]
    %v222 = vld [vmem:[%s0 + $0x1a0] sm:$0xff]
    %v223 = vld [vmem:[%s0 + $0x1a8] sm:$0xff]
    %v224 = vld [vmem:[%s0 + $0x1b0] sm:$0xff]
    %v225 = vld [vmem:[%s0 + $0x1b8] sm:$0xff]
    %v226 = vld [vmem:[%s0 + $0x1c0] sm:$0xff]
    %v227 = vld [vmem:[%s0 + $0x1c8] sm:$0xff]
    %v228 = vld [vmem:[%s0 + $0x1d0] sm:$0xff]
    %v229 = vld [vmem:[%s0 + $0x1d8] sm:$0xff]
    %v230 = vld [vmem:[%s0 + $0x1e0] sm:$0xff]
    %v231 = vld [vmem:[%s0 + $0x1e8] sm:$0xff]
    %v232 = vld [vmem:[%s0 + $0x1f0] sm:$0xff]
    %v233 = vld [vmem:[%s0 + $0x1f8] sm:$0xff]
    %v234 = vld [vmem:[%s0 + $0x200] sm:$0xff]
    %v235 = vld [vmem:[%s0 + $0x208] sm:$0xff]
    %v236 = vld [vmem:[%s0 + $0x210] sm:$0xff]
    %v237 = vld [vmem:[%s0 + $0x218] sm:$0xff]
    %v238 = vld [vmem:[%s0 + $0x220] sm:$0xff]
    %v239 = vld [vmem:[%s0 + $0x228] sm:$0xff]
    %v240 = vld [vmem:[%s0 + $0x230] sm:$0xff]
    %v241 = vld [vmem:[%s0 + $0x238] sm:$0x11]
    %v242 = vld [vmem:[%s1] sm:$0xf]
    %v243 = vld [vmem:[%s1 + $0x4] sm:$0xf]
    %v244 = vld [vmem:[%s1 + $0x8] sm:$0xf]
    %v245 = vld [vmem:[%s1 + $0xc] sm:$0xf]
    %v246 = vld [vmem:[%s1 + $0x10] sm:$0xf]
    %v247 = vld [vmem:[%s1 + $0x14] sm:$0xf]
    %v248 = vld [vmem:[%s1 + $0x18] sm:$0xf]
    %v249 = vld [vmem:[%s1 + $0x1c] sm:$0xf]
    %v250 = vld [vmem:[%s1 + $0x20] sm:$0xf]
    %v251 = vld [vmem:[%s1 + $0x24] sm:$0xf]
    %v252 = vld [vmem:[%s1 + $0x28] sm:$0xf]
    %v253 = vld [vmem:[%s1 + $0x2c] sm:$0xf]
    %v254 = vld [vmem:[%s1 + $0x30] sm:$0xf]
    %v255 = vld [vmem:[%s1 + $0x34] sm:$0xf]
    %v256 = vld [vmem:[%s1 + $0x38] sm:$0xf]
    %v257 = vld [vmem:[%s1 + $0x3c] sm:$0xf]
    %v258 = vld [vmem:[%s1 + $0x40] sm:$0xf]
    %v259 = vld [vmem:[%s1 + $0x44] sm:$0xf]
    %v260 = vld [vmem:[%s1 + $0x48] sm:$0x3]
    %v333 = vunpack.c.l.b16 %v170
    %v334 = vunpack.c.h.b16 %v170
    %v335 = vunpack.c.l.b16 %v171
    %v336 = vunpack.c.h.b16 %v171
    %v337 = vunpack.c.l.b16 %v172
    %v338 = vunpack.c.h.b16 %v172
    %v339 = vunpack.c.l.b16 %v173
    %v340 = vunpack.c.h.b16 %v173
    %v341 = vunpack.c.l.b16 %v174
    %v342 = vunpack.c.h.b16 %v174
    %v343 = vunpack.c.l.b16 %v175
    %v344 = vunpack.c.h.b16 %v175
    %v345 = vunpack.c.l.b16 %v176
    %v346 = vunpack.c.h.b16 %v176
    %v347 = vunpack.c.l.b16 %v177
    %v348 = vunpack.c.h.b16 %v177
    %v349 = vunpack.c.l.b16 %v178
    %v350 = vunpack.c.h.b16 %v178
    %v351 = vunpack.c.l.b16 %v179
    %v352 = vunpack.c.h.b16 %v179
    %v353 = vunpack.c.l.b16 %v180
    %v354 = vunpack.c.h.b16 %v180
    %v355 = vunpack.c.l.b16 %v181
    %v356 = vunpack.c.h.b16 %v181
    %v357 = vunpack.c.l.b16 %v182
    %v358 = vunpack.c.h.b16 %v182
    %v359 = vunpack.c.l.b16 %v183
    %v360 = vunpack.c.h.b16 %v183
    %v361 = vunpack.c.l.b16 %v184
    %v362 = vunpack.c.h.b16 %v184
    %v363 = vunpack.c.l.b16 %v185
    %v364 = vunpack.c.h.b16 %v185
    %v365 = vunpack.c.l.b16 %v186
    %v366 = vunpack.c.h.b16 %v186
    %v367 = vunpack.c.l.b16 %v187
    %v368 = vunpack.c.h.b16 %v187
    %v369 = vunpack.c.l.b16 %v188
    %v370 = vunpack.c.h.b16 %v188
    %v371 = vunpack.c.l.b16 %v189
    %v372 = vunpack.c.h.b16 %v189
    %v373 = vunpack.c.l.b16 %v190
    %v374 = vunpack.c.h.b16 %v190
    %v375 = vunpack.c.l.b16 %v191
    %v376 = vunpack.c.h.b16 %v191
    %v377 = vunpack.c.l.b16 %v192
    %v378 = vunpack.c.h.b16 %v192
    %v379 = vunpack.c.l.b16 %v193
    %v380 = vunpack.c.h.b16 %v193
    %v381 = vunpack.c.l.b16 %v194
    %v382 = vunpack.c.h.b16 %v194
    %v383 = vunpack.c.l.b16 %v195
    %v384 = vunpack.c.h.b16 %v195
    %v385 = vunpack.c.l.b16 %v196
    %v386 = vunpack.c.h.b16 %v196
    %v387 = vunpack.c.l.b16 %v197
    %v388 = vunpack.c.h.b16 %v197
    %v389 = vunpack.c.l.b16 %v198
    %v390 = vunpack.c.h.b16 %v198
    %v391 = vunpack.c.l.b16 %v199
    %v392 = vunpack.c.h.b16 %v199
    %v393 = vunpack.c.l.b16 %v200
    %v394 = vunpack.c.h.b16 %v200
    %v395 = vunpack.c.l.b16 %v201
    %v396 = vunpack.c.h.b16 %v201
    %v397 = vunpack.c.l.b16 %v202
    %v398 = vunpack.c.h.b16 %v202
    %v399 = vunpack.c.l.b16 %v203
    %v400 = vunpack.c.h.b16 %v203
    %v401 = vunpack.c.l.b16 %v204
    %v402 = vunpack.c.h.b16 %v204
    %v403 = vunpack.c.l.b16 %v205
    %v404 = vunpack.c.h.b16 %v205
    %v405 = vunpack.c.l.b16 %v206
    %v406 = vunpack.c.h.b16 %v206
    %v407 = vunpack.c.l.b16 %v207
    %v408 = vunpack.c.h.b16 %v207
    %v409 = vunpack.c.l.b16 %v208
    %v410 = vunpack.c.h.b16 %v208
    %v411 = vunpack.c.l.b16 %v209
    %v412 = vunpack.c.h.b16 %v209
    %v413 = vunpack.c.l.b16 %v210
    %v414 = vunpack.c.h.b16 %v210
    %v415 = vunpack.c.l.b16 %v211
    %v416 = vunpack.c.h.b16 %v211
    %v417 = vunpack.c.l.b16 %v212
    %v418 = vunpack.c.h.b16 %v212
    %v419 = vunpack.c.l.b16 %v213
    %v420 = vunpack.c.h.b16 %v213
    %v421 = vunpack.c.l.b16 %v214
    %v422 = vunpack.c.h.b16 %v214
    %v423 = vunpack.c.l.b16 %v215
    %v424 = vunpack.c.h.b16 %v215
    %v425 = vunpack.c.l.b16 %v216
    %v426 = vunpack.c.h.b16 %v216
    %v427 = vunpack.c.l.b16 %v217
    %v428 = vunpack.c.h.b16 %v217
    %v429 = vunpack.c.l.b16 %v218
    %v430 = vunpack.c.h.b16 %v218
    %v431 = vunpack.c.l.b16 %v219
    %v432 = vunpack.c.h.b16 %v219
    %v433 = vunpack.c.l.b16 %v220
    %v434 = vunpack.c.h.b16 %v220
    %v435 = vunpack.c.l.b16 %v221
    %v436 = vunpack.c.h.b16 %v221
    %v437 = vunpack.c.l.b16 %v222
    %v438 = vunpack.c.h.b16 %v222
    %v439 = vunpack.c.l.b16 %v223
    %v440 = vunpack.c.h.b16 %v223
    %v441 = vunpack.c.l.b16 %v224
    %v442 = vunpack.c.h.b16 %v224
    %v443 = vunpack.c.l.b16 %v225
    %v444 = vunpack.c.h.b16 %v225
    %v445 = vunpack.c.l.b16 %v226
    %v446 = vunpack.c.h.b16 %v226
    %v447 = vunpack.c.l.b16 %v227
    %v448 = vunpack.c.h.b16 %v227
    %v449 = vunpack.c.l.b16 %v228
    %v450 = vunpack.c.h.b16 %v228
    %v451 = vunpack.c.l.b16 %v229
    %v452 = vunpack.c.h.b16 %v229
    %v453 = vunpack.c.l.b16 %v230
    %v454 = vunpack.c.h.b16 %v230
    %v455 = vunpack.c.l.b16 %v231
    %v456 = vunpack.c.h.b16 %v231
    %v457 = vunpack.c.l.b16 %v232
    %v458 = vunpack.c.h.b16 %v232
    %v459 = vunpack.c.l.b16 %v233
    %v460 = vunpack.c.h.b16 %v233
    %v461 = vunpack.c.l.b16 %v234
    %v462 = vunpack.c.h.b16 %v234
    %v463 = vunpack.c.l.b16 %v235
    %v464 = vunpack.c.h.b16 %v235
    %v465 = vunpack.c.l.b16 %v236
    %v466 = vunpack.c.h.b16 %v236
    %v467 = vunpack.c.l.b16 %v237
    %v468 = vunpack.c.h.b16 %v237
    %v469 = vunpack.c.l.b16 %v238
    %v470 = vunpack.c.h.b16 %v238
    %v471 = vunpack.c.l.b16 %v239
    %v472 = vunpack.c.h.b16 %v239
    %v473 = vunpack.c.l.b16 %v240
    %v474 = vunpack.c.h.b16 %v240
    %v475 = vunpack.c.l.b16 %v241
    %v476 = vunpack.c.h.b16 %v241
    %v477 = vpack.c.b16 %v335, %v333
    %v478 = vpack.c.b16 %v336, %v334
    %v479 = vpack.c.b16 %v339, %v337
    %v480 = vpack.c.b16 %v340, %v338
    %v481 = vpack.c.b16 %v343, %v341
    %v482 = vpack.c.b16 %v344, %v342
    %v483 = vpack.c.b16 %v347, %v345
    %v484 = vpack.c.b16 %v348, %v346
    %v485 = vpack.c.b16 %v351, %v349
    %v486 = vpack.c.b16 %v352, %v350
    %v487 = vpack.c.b16 %v355, %v353
    %v488 = vpack.c.b16 %v356, %v354
    %v489 = vpack.c.b16 %v359, %v357
    %v490 = vpack.c.b16 %v360, %v358
    %v491 = vpack.c.b16 %v363, %v361
    %v492 = vpack.c.b16 %v364, %v362
    %v493 = vpack.c.b16 %v367, %v365
    %v494 = vpack.c.b16 %v368, %v366
    %v495 = vpack.c.b16 %v371, %v369
    %v496 = vpack.c.b16 %v372, %v370
    %v497 = vpack.c.b16 %v375, %v373
    %v498 = vpack.c.b16 %v376, %v374
    %v499 = vpack.c.b16 %v379, %v377
    %v500 = vpack.c.b16 %v380, %v378
    %v501 = vpack.c.b16 %v383, %v381
    %v502 = vpack.c.b16 %v384, %v382
    %v503 = vpack.c.b16 %v387, %v385
    %v504 = vpack.c.b16 %v388, %v386
    %v505 = vpack.c.b16 %v391, %v389
    %v506 = vpack.c.b16 %v392, %v390
    %v507 = vpack.c.b16 %v395, %v393
    %v508 = vpack.c.b16 %v396, %v394
    %v509 = vpack.c.b16 %v399, %v397
    %v510 = vpack.c.b16 %v400, %v398
    %v511 = vpack.c.b16 %v403, %v401
    %v512 = vpack.c.b16 %v404, %v402
    %v513 = vpack.c.b16 %v407, %v405
    %v514 = vpack.c.b16 %v408, %v406
    %v515 = vpack.c.b16 %v411, %v409
    %v516 = vpack.c.b16 %v412, %v410
    %v517 = vpack.c.b16 %v415, %v413
    %v518 = vpack.c.b16 %v416, %v414
    %v519 = vpack.c.b16 %v419, %v417
    %v520 = vpack.c.b16 %v420, %v418
    %v521 = vpack.c.b16 %v423, %v421
    %v522 = vpack.c.b16 %v424, %v422
    %v523 = vpack.c.b16 %v427, %v425
    %v524 = vpack.c.b16 %v428, %v426
    %v525 = vpack.c.b16 %v431, %v429
    %v526 = vpack.c.b16 %v432, %v430
    %v527 = vpack.c.b16 %v435, %v433
    %v528 = vpack.c.b16 %v436, %v434
    %v529 = vpack.c.b16 %v439, %v437
    %v530 = vpack.c.b16 %v440, %v438
    %v531 = vpack.c.b16 %v443, %v441
    %v532 = vpack.c.b16 %v444, %v442
    %v533 = vpack.c.b16 %v447, %v445
    %v534 = vpack.c.b16 %v448, %v446
    %v535 = vpack.c.b16 %v451, %v449
    %v536 = vpack.c.b16 %v452, %v450
    %v537 = vpack.c.b16 %v455, %v453
    %v538 = vpack.c.b16 %v456, %v454
    %v539 = vpack.c.b16 %v459, %v457
    %v540 = vpack.c.b16 %v460, %v458
    %v541 = vpack.c.b16 %v463, %v461
    %v542 = vpack.c.b16 %v464, %v462
    %v543 = vpack.c.b16 %v467, %v465
    %v544 = vpack.c.b16 %v468, %v466
    %v545 = vpack.c.b16 %v471, %v469
    %v546 = vpack.c.b16 %v472, %v470
    %v547 = vpack.c.b16 %v475, %v473
    %v548 = vpack.c.b16 %v476, %v474
    %v604 = vunpack.c.l.b16 %v242
    %v605 = vunpack.c.l.b16 %v243
    %v606 = vunpack.c.l.b16 %v244
    %v607 = vunpack.c.l.b16 %v245
    %v608 = vunpack.c.l.b16 %v246
    %v609 = vunpack.c.l.b16 %v247
    %v610 = vunpack.c.l.b16 %v248
    %v611 = vunpack.c.l.b16 %v249
    %v612 = vunpack.c.l.b16 %v250
    %v613 = vunpack.c.l.b16 %v251
    %v614 = vunpack.c.l.b16 %v252
    %v615 = vunpack.c.l.b16 %v253
    %v616 = vunpack.c.l.b16 %v254
    %v617 = vunpack.c.l.b16 %v255
    %v618 = vunpack.c.l.b16 %v256
    %v619 = vunpack.c.l.b16 %v257
    %v620 = vunpack.c.l.b16 %v258
    %v621 = vunpack.c.l.b16 %v259
    %v622 = vunpack.c.l.b16 %v260
    %v623 = vpack.c.b16 %v605, %v604
    %v624 = vpack.c.b16 %v607, %v606
    %v625 = vpack.c.b16 %v609, %v608
    %v626 = vpack.c.b16 %v611, %v610
    %v627 = vpack.c.b16 %v613, %v612
    %v628 = vpack.c.b16 %v615, %v614
    %v629 = vpack.c.b16 %v617, %v616
    %v630 = vpack.c.b16 %v619, %v618
    %v631 = vpack.c.b16 %v621, %v620
    %v632 = vpack.c.b16 %v622, %v622
    %vm642 = vcmask 154624
    %v644 = vsel %vm642, %v478, 0
    %v647 = vsel %vm642, %v480, 0
    %v650 = vsel %vm642, %v482, 0
    %v653 = vsel %vm642, %v484, 0
    %v656 = vsel %vm642, %v486, 0
    %v659 = vsel %vm642, %v488, 0
    %v662 = vsel %vm642, %v490, 0
    %v665 = vsel %vm642, %v492, 0
    %v668 = vsel %vm642, %v494, 0
    %v671 = vsel %vm642, %v496, 0
    %v674 = vsel %vm642, %v498, 0
    %v677 = vsel %vm642, %v500, 0
    %v680 = vsel %vm642, %v502, 0
    %v683 = vsel %vm642, %v504, 0
    %v686 = vsel %vm642, %v506, 0
    %v689 = vsel %vm642, %v508, 0
    %v692 = vsel %vm642, %v510, 0
    %v695 = vsel %vm642, %v512, 0
    %v698 = vsel %vm642, %v514, 0
    %v701 = vsel %vm642, %v516, 0
    %v704 = vsel %vm642, %v518, 0
    %v707 = vsel %vm642, %v520, 0
    %v710 = vsel %vm642, %v522, 0
    %v713 = vsel %vm642, %v524, 0
    %v716 = vsel %vm642, %v526, 0
    %v719 = vsel %vm642, %v528, 0
    %v722 = vsel %vm642, %v530, 0
    %v725 = vsel %vm642, %v532, 0
    %v728 = vsel %vm642, %v534, 0
    %v731 = vsel %vm642, %v536, 0
    %v734 = vsel %vm642, %v538, 0
    %v737 = vsel %vm642, %v540, 0
    %v740 = vsel %vm642, %v542, 0
    %v743 = vsel %vm642, %v544, 0
    %v746 = vsel %vm642, %v546, 0
    %v749 = vsel %vm642, %v548, 0
    %vm751 = vcmask 1040384
    %vm752 = vcmask 1041408
    %v753 = vsel %vm751, 4294967295, 65535
    %v754 = vsel %vm752, %v753, 0
    %v756 = vand.u32 %v632, %v754
    %758 = vmatprep.subr.bf16.mxu0 0
    %759 = vmatpush1.bf16.msra.mxu0 %v623
    %760 = vmatprep.subr.bf16.mxu0 0
    %761 = vmatpush1.bf16.msra.mxu0 %v624
    %762 = vmatprep.subr.bf16.mxu0 0
    %763 = vmatpush1.bf16.msra.mxu0 %v625
    %764 = vmatprep.subr.bf16.mxu0 0
    %765 = vmatpush1.bf16.msra.mxu0 %v626
    %766 = vmatprep.subr.bf16.mxu0 0
    %767 = vmatpush1.bf16.msra.mxu0 %v627
    %768 = vmatprep.subr.bf16.mxu0 0
    %769 = vmatpush1.bf16.msra.mxu0 %v628
    %770 = vmatprep.subr.bf16.mxu0 0
    %771 = vmatpush1.bf16.msra.mxu0 %v629
    %772 = vmatprep.subr.bf16.mxu0 0
    %773 = vmatpush1.bf16.msra.mxu0 %v630
    %774 = vmatprep.subr.bf16.mxu0 0
    %775 = vmatpush1.bf16.msra.mxu0 %v631
    %776 = vmatprep.subr.bf16.mxu0 0
    %777 = vmatpush1.bf16.msra.mxu0 %v756
    %778 = vmatprep.subr.bf16.mxu0 0
    %779 = vmatpush1.bf16.msra.mxu0 0
    %780 = vmatprep.subr.bf16.mxu0 0
    %781 = vmatpush1.bf16.msra.mxu0 0
    %782 = vmatprep.subr.bf16.mxu0 0
    %783 = vmatpush1.bf16.msra.mxu0 0
    %784 = vmatprep.subr.bf16.mxu0 0
    %785 = vmatpush1.bf16.msra.mxu0 0
    %786 = vmatprep.subr.bf16.mxu0 0
    %787 = vmatpush1.bf16.msra.mxu0 0
    %788 = vmatprep.subr.bf16.mxu0 0
    %789 = vmatpush1.bf16.msra.mxu0 0
    %790 = vmatprep.mubr.bf16.mxu0 %v644
    %791 = vmatmul.mubr.bf16.gmra.mrb[0].mxu0 %v477
    %v792 = vpop.f32.mrb[0].mxu0
    %v793 = vadd.f32 0.0, %v792
    %v794 = vpop.f32.mrb[0].mxu0
    %v795 = vpop.f32.mrb[0].mxu0
    %v796 = vadd.f32 0.0, %v795
    %v797 = vpop.f32.mrb[0].mxu0
    %798 = vmatprep.mubr.bf16.mxu0 %v647
    %799 = vmatmul.mubr.bf16.gmra.mrb[0].mxu0 %v479
    %v800 = vpop.f32.mrb[0].mxu0
    %v801 = vadd.f32 0.0, %v800
    %v802 = vpop.f32.mrb[0].mxu0
    %v803 = vpop.f32.mrb[0].mxu0
    %v804 = vadd.f32 0.0, %v803
    %v805 = vpop.f32.mrb[0].mxu0
    %806 = vmatprep.mubr.bf16.mxu0 %v650
    %807 = vmatmul.mubr.bf16.gmra.mrb[0].mxu0 %v481
    %v808 = vpop.f32.mrb[0].mxu0
    %v809 = vadd.f32 0.0, %v808
    %v810 = vpop.f32.mrb[0].mxu0
    %v811 = vpop.f32.mrb[0].mxu0
    %v812 = vadd.f32 0.0, %v811
    %v813 = vpop.f32.mrb[0].mxu0
    %814 = vmatprep.mubr.bf16.mxu0 %v653
    %815 = vmatmul.mubr.bf16.gmra.mrb[0].mxu0 %v483
    %v816 = vpop.f32.mrb[0].mxu0
    %v817 = vadd.f32 0.0, %v816
    %v818 = vpop.f32.mrb[0].mxu0
    %v819 = vpop.f32.mrb[0].mxu0
    %v820 = vadd.f32 0.0, %v819
    %v821 = vpop.f32.mrb[0].mxu0
    %822 = vmatprep.mubr.bf16.mxu0 %v656
    %823 = vmatmul.mubr.bf16.gmra.mrb[0].mxu0 %v485
    %v824 = vpop.f32.mrb[0].mxu0
    %v825 = vadd.f32 0.0, %v824
    %v826 = vpop.f32.mrb[0].mxu0
    %v827 = vpop.f32.mrb[0].mxu0
    %v828 = vadd.f32 0.0, %v827
    %v829 = vpop.f32.mrb[0].mxu0
    %830 = vmatprep.mubr.bf16.mxu0 %v659
    %831 = vmatmul.mubr.bf16.gmra.mrb[0].mxu0 %v487
    %v832 = vpop.f32.mrb[0].mxu0
    %v833 = vadd.f32 0.0, %v832
    %v834 = vpop.f32.mrb[0].mxu0
    %v835 = vpop.f32.mrb[0].mxu0
    %v836 = vadd.f32 0.0, %v835
    %v837 = vpop.f32.mrb[0].mxu0
    %838 = vmatprep.mubr.bf16.mxu0 %v662
    %839 = vmatmul.mubr.bf16.gmra.mrb[0].mxu0 %v489
    %v840 = vpop.f32.mrb[0].mxu0
    %v841 = vadd.f32 0.0, %v840
    %v842 = vpop.f32.mrb[0].mxu0
    %v843 = vpop.f32.mrb[0].mxu0
    %v844 = vadd.f32 0.0, %v843
    %v845 = vpop.f32.mrb[0].mxu0
    %846 = vmatprep.mubr.bf16.mxu0 %v665
    %847 = vmatmul.mubr.bf16.gmra.mrb[0].mxu0 %v491
    %v848 = vpop.f32.mrb[0].mxu0
    %v849 = vadd.f32 0.0, %v848
    %v850 = vpop.f32.mrb[0].mxu0
    %v851 = vpop.f32.mrb[0].mxu0
    %v852 = vadd.f32 0.0, %v851
    %v853 = vpop.f32.mrb[0].mxu0
    %854 = vmatprep.mubr.bf16.mxu0 %v668
    %855 = vmatmul.mubr.bf16.gmra.mrb[0].mxu0 %v493
    %v856 = vpop.f32.mrb[0].mxu0
    %v857 = vadd.f32 0.0, %v856
    %v858 = vpop.f32.mrb[0].mxu0
    %v859 = vpop.f32.mrb[0].mxu0
    %v860 = vadd.f32 0.0, %v859
    %v861 = vpop.f32.mrb[0].mxu0
    %862 = vmatprep.mubr.bf16.mxu0 %v671
    %863 = vmatmul.mubr.bf16.gmra.mrb[0].mxu0 %v495
    %v864 = vpop.f32.mrb[0].mxu0
    %v865 = vadd.f32 0.0, %v864
    %v866 = vpop.f32.mrb[0].mxu0
    %v867 = vpop.f32.mrb[0].mxu0
    %v868 = vadd.f32 0.0, %v867
    %v869 = vpop.f32.mrb[0].mxu0
    %870 = vmatprep.mubr.bf16.mxu0 %v674
    %871 = vmatmul.mubr.bf16.gmra.mrb[0].mxu0 %v497
    %v872 = vpop.f32.mrb[0].mxu0
    %v873 = vadd.f32 0.0, %v872
    %v874 = vpop.f32.mrb[0].mxu0
    %v875 = vpop.f32.mrb[0].mxu0
    %v876 = vadd.f32 0.0, %v875
    %v877 = vpop.f32.mrb[0].mxu0
    %878 = vmatprep.mubr.bf16.mxu0 %v677
    %879 = vmatmul.mubr.bf16.gmra.mrb[0].mxu0 %v499
    %v880 = vpop.f32.mrb[0].mxu0
    %v881 = vadd.f32 0.0, %v880
    %v882 = vpop.f32.mrb[0].mxu0
    %v883 = vpop.f32.mrb[0].mxu0
    %v884 = vadd.f32 0.0, %v883
    %v885 = vpop.f32.mrb[0].mxu0
    %886 = vmatprep.mubr.bf16.mxu0 %v680
    %887 = vmatmul.mubr.bf16.gmra.mrb[0].mxu0 %v501
    %v888 = vpop.f32.mrb[0].mxu0
    %v889 = vadd.f32 0.0, %v888
    %v890 = vpop.f32.mrb[0].mxu0
    %v891 = vpop.f32.mrb[0].mxu0
    %v892 = vadd.f32 0.0, %v891
    %v893 = vpop.f32.mrb[0].mxu0
    %894 = vmatprep.mubr.bf16.mxu0 %v683
    %895 = vmatmul.mubr.bf16.gmra.mrb[0].mxu0 %v503
    %v896 = vpop.f32.mrb[0].mxu0
    %v897 = vadd.f32 0.0, %v896
    %v898 = vpop.f32.mrb[0].mxu0
    %v899 = vpop.f32.mrb[0].mxu0
    %v900 = vadd.f32 0.0, %v899
    %v901 = vpop.f32.mrb[0].mxu0
    %902 = vmatprep.mubr.bf16.mxu0 %v686
    %903 = vmatmul.mubr.bf16.gmra.mrb[0].mxu0 %v505
    %v904 = vpop.f32.mrb[0].mxu0
    %v905 = vadd.f32 0.0, %v904
    %v906 = vpop.f32.mrb[0].mxu0
    %v907 = vpop.f32.mrb[0].mxu0
    %v908 = vadd.f32 0.0, %v907
    %v909 = vpop.f32.mrb[0].mxu0
    %910 = vmatprep.mubr.bf16.mxu0 %v689
    %911 = vmatmul.mubr.bf16.gmra.mrb[0].mxu0 %v507
    %v912 = vpop.f32.mrb[0].mxu0
    %v913 = vadd.f32 0.0, %v912
    %v914 = vpop.f32.mrb[0].mxu0
    %v915 = vpop.f32.mrb[0].mxu0
    %v916 = vadd.f32 0.0, %v915
    %v917 = vpop.f32.mrb[0].mxu0
    %918 = vmatprep.mubr.bf16.mxu0 %v692
    %919 = vmatmul.mubr.bf16.gmra.mrb[0].mxu0 %v509
    %v920 = vpop.f32.mrb[0].mxu0
    %v921 = vadd.f32 0.0, %v920
    %v922 = vpop.f32.mrb[0].mxu0
    %v923 = vpop.f32.mrb[0].mxu0
    %v924 = vadd.f32 0.0, %v923
    %v925 = vpop.f32.mrb[0].mxu0
    %926 = vmatprep.mubr.bf16.mxu0 %v695
    %927 = vmatmul.mubr.bf16.gmra.mrb[0].mxu0 %v511
    %v928 = vpop.f32.mrb[0].mxu0
    %v929 = vadd.f32 0.0, %v928
    %v930 = vpop.f32.mrb[0].mxu0
    %v931 = vpop.f32.mrb[0].mxu0
    %v932 = vadd.f32 0.0, %v931
    %v933 = vpop.f32.mrb[0].mxu0
    %934 = vmatprep.mubr.bf16.mxu0 %v698
    %935 = vmatmul.mubr.bf16.gmra.mrb[0].mxu0 %v513
    %v936 = vpop.f32.mrb[0].mxu0
    %v937 = vadd.f32 0.0, %v936
    %v938 = vpop.f32.mrb[0].mxu0
    %v939 = vpop.f32.mrb[0].mxu0
    %v940 = vadd.f32 0.0, %v939
    %v941 = vpop.f32.mrb[0].mxu0
    %942 = vmatprep.mubr.bf16.mxu0 %v701
    %943 = vmatmul.mubr.bf16.gmra.mrb[0].mxu0 %v515
    %v944 = vpop.f32.mrb[0].mxu0
    %v945 = vadd.f32 0.0, %v944
    %v946 = vpop.f32.mrb[0].mxu0
    %v947 = vpop.f32.mrb[0].mxu0
    %v948 = vadd.f32 0.0, %v947
    %v949 = vpop.f32.mrb[0].mxu0
    %950 = vmatprep.mubr.bf16.mxu0 %v704
    %951 = vmatmul.mubr.bf16.gmra.mrb[0].mxu0 %v517
    %v952 = vpop.f32.mrb[0].mxu0
    %v953 = vadd.f32 0.0, %v952
    %v954 = vpop.f32.mrb[0].mxu0
    %v955 = vpop.f32.mrb[0].mxu0
    %v956 = vadd.f32 0.0, %v955
    %v957 = vpop.f32.mrb[0].mxu0
    %958 = vmatprep.mubr.bf16.mxu0 %v707
    %959 = vmatmul.mubr.bf16.gmra.mrb[0].mxu0 %v519
    %v960 = vpop.f32.mrb[0].mxu0
    %v961 = vadd.f32 0.0, %v960
    %v962 = vpop.f32.mrb[0].mxu0
    %v963 = vpop.f32.mrb[0].mxu0
    %v964 = vadd.f32 0.0, %v963
    %v965 = vpop.f32.mrb[0].mxu0
    %966 = vmatprep.mubr.bf16.mxu0 %v710
    %967 = vmatmul.mubr.bf16.gmra.mrb[0].mxu0 %v521
    %v968 = vpop.f32.mrb[0].mxu0
    %v969 = vadd.f32 0.0, %v968
    %v970 = vpop.f32.mrb[0].mxu0
    %v971 = vpop.f32.mrb[0].mxu0
    %v972 = vadd.f32 0.0, %v971
    %v973 = vpop.f32.mrb[0].mxu0
    %974 = vmatprep.mubr.bf16.mxu0 %v713
    %975 = vmatmul.mubr.bf16.gmra.mrb[0].mxu0 %v523
    %v976 = vpop.f32.mrb[0].mxu0
    %v977 = vadd.f32 0.0, %v976
    %v978 = vpop.f32.mrb[0].mxu0
    %v979 = vpop.f32.mrb[0].mxu0
    %v980 = vadd.f32 0.0, %v979
    %v981 = vpop.f32.mrb[0].mxu0
    %982 = vmatprep.mubr.bf16.mxu0 %v716
    %983 = vmatmul.mubr.bf16.gmra.mrb[0].mxu0 %v525
    %v984 = vpop.f32.mrb[0].mxu0
    %v985 = vadd.f32 0.0, %v984
    %v986 = vpop.f32.mrb[0].mxu0
    %v987 = vpop.f32.mrb[0].mxu0
    %v988 = vadd.f32 0.0, %v987
    %v989 = vpop.f32.mrb[0].mxu0
    %990 = vmatprep.mubr.bf16.mxu0 %v719
    %991 = vmatmul.mubr.bf16.gmra.mrb[0].mxu0 %v527
    %v992 = vpop.f32.mrb[0].mxu0
    %v993 = vadd.f32 0.0, %v992
    %v994 = vpop.f32.mrb[0].mxu0
    %v995 = vpop.f32.mrb[0].mxu0
    %v996 = vadd.f32 0.0, %v995
    %v997 = vpop.f32.mrb[0].mxu0
    %998 = vmatprep.mubr.bf16.mxu0 %v722
    %999 = vmatmul.mubr.bf16.gmra.mrb[0].mxu0 %v529
    %v1000 = vpop.f32.mrb[0].mxu0
    %v1001 = vadd.f32 0.0, %v1000
    %v1002 = vpop.f32.mrb[0].mxu0
    %v1003 = vpop.f32.mrb[0].mxu0
    %v1004 = vadd.f32 0.0, %v1003
    %v1005 = vpop.f32.mrb[0].mxu0
    %1006 = vmatprep.mubr.bf16.mxu0 %v725
    %1007 = vmatmul.mubr.bf16.gmra.mrb[0].mxu0 %v531
    %v1008 = vpop.f32.mrb[0].mxu0
    %v1009 = vadd.f32 0.0, %v1008
    %v1010 = vpop.f32.mrb[0].mxu0
    %v1011 = vpop.f32.mrb[0].mxu0
    %v1012 = vadd.f32 0.0, %v1011
    %v1013 = vpop.f32.mrb[0].mxu0
    %1014 = vmatprep.mubr.bf16.mxu0 %v728
    %1015 = vmatmul.mubr.bf16.gmra.mrb[0].mxu0 %v533
    %v1016 = vpop.f32.mrb[0].mxu0
    %v1017 = vadd.f32 0.0, %v1016
    %v1018 = vpop.f32.mrb[0].mxu0
    %v1019 = vpop.f32.mrb[0].mxu0
    %v1020 = vadd.f32 0.0, %v1019
    %v1021 = vpop.f32.mrb[0].mxu0
    %1022 = vmatprep.mubr.bf16.mxu0 %v731
    %1023 = vmatmul.mubr.bf16.gmra.mrb[0].mxu0 %v535
    %v1024 = vpop.f32.mrb[0].mxu0
    %v1025 = vadd.f32 0.0, %v1024
    %v1026 = vpop.f32.mrb[0].mxu0
    %v1027 = vpop.f32.mrb[0].mxu0
    %v1028 = vadd.f32 0.0, %v1027
    %v1029 = vpop.f32.mrb[0].mxu0
    %1030 = vmatprep.mubr.bf16.mxu0 %v734
    %1031 = vmatmul.mubr.bf16.gmra.mrb[0].mxu0 %v537
    %v1032 = vpop.f32.mrb[0].mxu0
    %v1033 = vadd.f32 0.0, %v1032
    %v1034 = vpop.f32.mrb[0].mxu0
    %v1035 = vpop.f32.mrb[0].mxu0
    %v1036 = vadd.f32 0.0, %v1035
    %v1037 = vpop.f32.mrb[0].mxu0
    %1038 = vmatprep.mubr.bf16.mxu0 %v737
    %1039 = vmatmul.mubr.bf16.gmra.mrb[0].mxu0 %v539
    %v1040 = vpop.f32.mrb[0].mxu0
    %v1041 = vadd.f32 0.0, %v1040
    %v1042 = vpop.f32.mrb[0].mxu0
    %v1043 = vpop.f32.mrb[0].mxu0
    %v1044 = vadd.f32 0.0, %v1043
    %v1045 = vpop.f32.mrb[0].mxu0
    %1046 = vmatprep.mubr.bf16.mxu0 %v740
    %1047 = vmatmul.mubr.bf16.gmra.mrb[0].mxu0 %v541
    %v1048 = vpop.f32.mrb[0].mxu0
    %v1049 = vadd.f32 0.0, %v1048
    %v1050 = vpop.f32.mrb[0].mxu0
    %v1051 = vpop.f32.mrb[0].mxu0
    %v1052 = vadd.f32 0.0, %v1051
    %v1053 = vpop.f32.mrb[0].mxu0
    %1054 = vmatprep.mubr.bf16.mxu0 %v743
    %1055 = vmatmul.mubr.bf16.gmra.mrb[0].mxu0 %v543
    %v1056 = vpop.f32.mrb[0].mxu0
    %v1057 = vadd.f32 0.0, %v1056
    %v1058 = vpop.f32.mrb[0].mxu0
    %v1059 = vpop.f32.mrb[0].mxu0
    %v1060 = vadd.f32 0.0, %v1059
    %v1061 = vpop.f32.mrb[0].mxu0
    %1062 = vmatprep.mubr.bf16.mxu0 %v746
    %1063 = vmatmul.mubr.bf16.gmra.mrb[0].mxu0 %v545
    %v1064 = vpop.f32.mrb[0].mxu0
    %v1065 = vadd.f32 0.0, %v1064
    %v1066 = vpop.f32.mrb[0].mxu0
    %v1067 = vpop.f32.mrb[0].mxu0
    %v1068 = vadd.f32 0.0, %v1067
    %v1069 = vpop.f32.mrb[0].mxu0
    %1070 = vmatprep.mubr.bf16.mxu0 %v749
    %1071 = vmatmul.mubr.bf16.gmra.mrb[0].mxu0 %v547
    %v1072 = vpop.f32.mrb[0].mxu0
    %v1073 = vadd.f32 0.0, %v1072
    %v1074 = vpop.f32.mrb[0].mxu0
    %v1075 = vpop.f32.mrb[0].mxu0
    %v1076 = vadd.f32 0.0, %v1075
    %v1077 = vpop.f32.mrb[0].mxu0
    %1078 = vdwg.mxu0
    %v1079 = vadd.f32 %v98, %v793
    %v1080 = vadd.f32 %v99, %v796
    %v1081 = vadd.f32 %v100, %v801
    %v1082 = vadd.f32 %v101, %v804
    %v1083 = vadd.f32 %v102, %v809
    %v1084 = vadd.f32 %v103, %v812
    %v1085 = vadd.f32 %v104, %v817
    %v1086 = vadd.f32 %v105, %v820
    %v1087 = vadd.f32 %v106, %v825
    %v1088 = vadd.f32 %v107, %v828
    %v1089 = vadd.f32 %v108, %v833
    %v1090 = vadd.f32 %v109, %v836
    %v1091 = vadd.f32 %v110, %v841
    %v1092 = vadd.f32 %v111, %v844
    %v1093 = vadd.f32 %v112, %v849
    %v1094 = vadd.f32 %v113, %v852
    %v1095 = vadd.f32 %v114, %v857
    %v1096 = vadd.f32 %v115, %v860
    %v1097 = vadd.f32 %v116, %v865
    %v1098 = vadd.f32 %v117, %v868
    %v1099 = vadd.f32 %v118, %v873
    %v1100 = vadd.f32 %v119, %v876
    %v1101 = vadd.f32 %v120, %v881
    %v1102 = vadd.f32 %v121, %v884
    %v1103 = vadd.f32 %v122, %v889
    %v1104 = vadd.f32 %v123, %v892
    %v1105 = vadd.f32 %v124, %v897
    %v1106 = vadd.f32 %v125, %v900
    %v1107 = vadd.f32 %v126, %v905
    %v1108 = vadd.f32 %v127, %v908
    %v1109 = vadd.f32 %v128, %v913
    %v1110 = vadd.f32 %v129, %v916
    %v1111 = vadd.f32 %v130, %v921
    %v1112 = vadd.f32 %v131, %v924
    %v1113 = vadd.f32 %v132, %v929
    %v1114 = vadd.f32 %v133, %v932
    %v1115 = vadd.f32 %v134, %v937
    %v1116 = vadd.f32 %v135, %v940
    %v1117 = vadd.f32 %v136, %v945
    %v1118 = vadd.f32 %v137, %v948
    %v1119 = vadd.f32 %v138, %v953
    %v1120 = vadd.f32 %v139, %v956
    %v1121 = vadd.f32 %v140, %v961
    %v1122 = vadd.f32 %v141, %v964
    %v1123 = vadd.f32 %v142, %v969
    %v1124 = vadd.f32 %v143, %v972
    %v1125 = vadd.f32 %v144, %v977
    %v1126 = vadd.f32 %v145, %v980
    %v1127 = vadd.f32 %v146, %v985
    %v1128 = vadd.f32 %v147, %v988
    %v1129 = vadd.f32 %v148, %v993
    %v1130 = vadd.f32 %v149, %v996
    %v1131 = vadd.f32 %v150, %v1001
    %v1132 = vadd.f32 %v151, %v1004
    %v1133 = vadd.f32 %v152, %v1009
    %v1134 = vadd.f32 %v153, %v1012
    %v1135 = vadd.f32 %v154, %v1017
    %v1136 = vadd.f32 %v155, %v1020
    %v1137 = vadd.f32 %v156, %v1025
    %v1138 = vadd.f32 %v157, %v1028
    %v1139 = vadd.f32 %v158, %v1033
    %v1140 = vadd.f32 %v159, %v1036
    %v1141 = vadd.f32 %v160, %v1041
    %v1142 = vadd.f32 %v161, %v1044
    %v1143 = vadd.f32 %v162, %v1049
    %v1144 = vadd.f32 %v163, %v1052
    %v1145 = vadd.f32 %v164, %v1057
    %v1146 = vadd.f32 %v165, %v1060
    %v1147 = vadd.f32 %v166, %v1065
    %v1148 = vadd.f32 %v167, %v1068
    %v1149 = vadd.f32 %v168, %v1073
    %v1150 = vadd.f32 %v169, %v1076
    %1151 = vst [vmem:[#allocation2] sm:$0xff] %v1079
    %1152 = vst [vmem:[#allocation2 + $0x8] sm:$0xff] %v1080
    %1153 = vst [vmem:[#allocation2 + $0x10] sm:$0xff] %v1081
    %1154 = vst [vmem:[#allocation2 + $0x18] sm:$0xff] %v1082
    %1155 = vst [vmem:[#allocation2 + $0x20] sm:$0xff] %v1083
    %1156 = vst [vmem:[#allocation2 + $0x28] sm:$0xff] %v1084
    %1157 = vst [vmem:[#allocation2 + $0x30] sm:$0xff] %v1085
    %1158 = vst [vmem:[#allocation2 + $0x38] sm:$0xff] %v1086
    %1159 = vst [vmem:[#allocation2 + $0x40] sm:$0xff] %v1087
    %1160 = vst [vmem:[#allocation2 + $0x48] sm:$0xff] %v1088
    %1161 = vst [vmem:[#allocation2 + $0x50] sm:$0xff] %v1089
    %1162 = vst [vmem:[#allocation2 + $0x58] sm:$0xff] %v1090
    %1163 = vst [vmem:[#allocation2 + $0x60] sm:$0xff] %v1091
    %1164 = vst [vmem:[#allocation2 + $0x68] sm:$0xff] %v1092
    %1165 = vst [vmem:[#allocation2 + $0x70] sm:$0xff] %v1093
    %1166 = vst [vmem:[#allocation2 + $0x78] sm:$0xff] %v1094
    %1167 = vst [vmem:[#allocation2 + $0x80] sm:$0xff] %v1095
    %1168 = vst [vmem:[#allocation2 + $0x88] sm:$0xff] %v1096
    %1169 = vst [vmem:[#allocation2 + $0x90] sm:$0xff] %v1097
    %1170 = vst [vmem:[#allocation2 + $0x98] sm:$0xff] %v1098
    %1171 = vst [vmem:[#allocation2 + $0xa0] sm:$0xff] %v1099
    %1172 = vst [vmem:[#allocation2 + $0xa8] sm:$0xff] %v1100
    %1173 = vst [vmem:[#allocation2 + $0xb0] sm:$0xff] %v1101
    %1174 = vst [vmem:[#allocation2 + $0xb8] sm:$0xff] %v1102
    %1175 = vst [vmem:[#allocation2 + $0xc0] sm:$0xff] %v1103
    %1176 = vst [vmem:[#allocation2 + $0xc8] sm:$0xff] %v1104
    %1177 = vst [vmem:[#allocation2 + $0xd0] sm:$0xff] %v1105
    %1178 = vst [vmem:[#allocation2 + $0xd8] sm:$0xff] %v1106
    %1179 = vst [vmem:[#allocation2 + $0xe0] sm:$0xff] %v1107
    %1180 = vst [vmem:[#allocation2 + $0xe8] sm:$0xff] %v1108
    %1181 = vst [vmem:[#allocation2 + $0xf0] sm:$0xff] %v1109
    %1182 = vst [vmem:[#allocation2 + $0xf8] sm:$0xff] %v1110
    %1183 = vst [vmem:[#allocation2 + $0x100] sm:$0xff] %v1111
    %1184 = vst [vmem:[#allocation2 + $0x108] sm:$0xff] %v1112
    %1185 = vst [vmem:[#allocation2 + $0x110] sm:$0xff] %v1113
    %1186 = vst [vmem:[#allocation2 + $0x118] sm:$0xff] %v1114
    %1187 = vst [vmem:[#allocation2 + $0x120] sm:$0xff] %v1115
    %1188 = vst [vmem:[#allocation2 + $0x128] sm:$0xff] %v1116
    %1189 = vst [vmem:[#allocation2 + $0x130] sm:$0xff] %v1117
    %1190 = vst [vmem:[#allocation2 + $0x138] sm:$0xff] %v1118
    %1191 = vst [vmem:[#allocation2 + $0x140] sm:$0xff] %v1119
    %1192 = vst [vmem:[#allocation2 + $0x148] sm:$0xff] %v1120
    %1193 = vst [vmem:[#allocation2 + $0x150] sm:$0xff] %v1121
    %1194 = vst [vmem:[#allocation2 + $0x158] sm:$0xff] %v1122
    %1195 = vst [vmem:[#allocation2 + $0x160] sm:$0xff] %v1123
    %1196 = vst [vmem:[#allocation2 + $0x168] sm:$0xff] %v1124
    %1197 = vst [vmem:[#allocation2 + $0x170] sm:$0xff] %v1125
    %1198 = vst [vmem:[#allocation2 + $0x178] sm:$0xff] %v1126
    %1199 = vst [vmem:[#allocation2 + $0x180] sm:$0xff] %v1127
    %1200 = vst [vmem:[#allocation2 + $0x188] sm:$0xff] %v1128
    %1201 = vst [vmem:[#allocation2 + $0x190] sm:$0xff] %v1129
    %1202 = vst [vmem:[#allocation2 + $0x198] sm:$0xff] %v1130
    %1203 = vst [vmem:[#allocation2 + $0x1a0] sm:$0xff] %v1131
    %1204 = vst [vmem:[#allocation2 + $0x1a8] sm:$0xff] %v1132
    %1205 = vst [vmem:[#allocation2 + $0x1b0] sm:$0xff] %v1133
    %1206 = vst [vmem:[#allocation2 + $0x1b8] sm:$0xff] %v1134
    %1207 = vst [vmem:[#allocation2 + $0x1c0] sm:$0xff] %v1135
    %1208 = vst [vmem:[#allocation2 + $0x1c8] sm:$0xff] %v1136
    %1209 = vst [vmem:[#allocation2 + $0x1d0] sm:$0xff] %v1137
    %1210 = vst [vmem:[#allocation2 + $0x1d8] sm:$0xff] %v1138
    %1211 = vst [vmem:[#allocation2 + $0x1e0] sm:$0xff] %v1139
    %1212 = vst [vmem:[#allocation2 + $0x1e8] sm:$0xff] %v1140
    %1213 = vst [vmem:[#allocation2 + $0x1f0] sm:$0xff] %v1141
    %1214 = vst [vmem:[#allocation2 + $0x1f8] sm:$0xff] %v1142
    %1215 = vst [vmem:[#allocation2 + $0x200] sm:$0xff] %v1143
    %1216 = vst [vmem:[#allocation2 + $0x208] sm:$0xff] %v1144
    %1217 = vst [vmem:[#allocation2 + $0x210] sm:$0xff] %v1145
    %1218 = vst [vmem:[#allocation2 + $0x218] sm:$0xff] %v1146
    %1219 = vst [vmem:[#allocation2 + $0x220] sm:$0xff] %v1147
    %1220 = vst [vmem:[#allocation2 + $0x228] sm:$0xff] %v1148
    %1221 = vst [vmem:[#allocation2 + $0x230] sm:$0xff] %v1149
    %1222 = vst [vmem:[#allocation2 + $0x238] sm:$0x3] %v1150
    // Predicated region
    $region26: #{tpu_custom_call.1} parent=1 // pred_check
      %p1223 = pneg %p22
    $region27: #{tpu_custom_call.1} parent=1 // pred_check_branch
      %1225 = sbr.rel (%p1223) target = $region29
    $region28: #{tpu_custom_call.1} parent=1 // pred_region
      %v1226 = vld [vmem:[#allocation2] sm:$0xff]
      %v1227 = vld [vmem:[#allocation2 + $0x8] sm:$0xff]
      %v1228 = vld [vmem:[#allocation2 + $0x10] sm:$0xff]
      %v1229 = vld [vmem:[#allocation2 + $0x18] sm:$0xff]
      %v1230 = vld [vmem:[#allocation2 + $0x20] sm:$0xff]
      %v1231 = vld [vmem:[#allocation2 + $0x28] sm:$0xff]
      %v1232 = vld [vmem:[#allocation2 + $0x30] sm:$0xff]
      %v1233 = vld [vmem:[#allocation2 + $0x38] sm:$0xff]
      %v1234 = vld [vmem:[#allocation2 + $0x40] sm:$0xff]
      %v1235 = vld [vmem:[#allocation2 + $0x48] sm:$0xff]
      %v1236 = vld [vmem:[#allocation2 + $0x50] sm:$0xff]
      %v1237 = vld [vmem:[#allocation2 + $0x58] sm:$0xff]
      %v1238 = vld [vmem:[#allocation2 + $0x60] sm:$0xff]
      %v1239 = vld [vmem:[#allocation2 + $0x68] sm:$0xff]
      %v1240 = vld [vmem:[#allocation2 + $0x70] sm:$0xff]
      %v1241 = vld [vmem:[#allocation2 + $0x78] sm:$0xff]
      %v1242 = vld [vmem:[#allocation2 + $0x80] sm:$0xff]
      %v1243 = vld [vmem:[#allocation2 + $0x88] sm:$0xff]
      %v1244 = vld [vmem:[#allocation2 + $0x90] sm:$0xff]
      %v1245 = vld [vmem:[#allocation2 + $0x98] sm:$0xff]
      %v1246 = vld [vmem:[#allocation2 + $0xa0] sm:$0xff]
      %v1247 = vld [vmem:[#allocation2 + $0xa8] sm:$0xff]
      %v1248 = vld [vmem:[#allocation2 + $0xb0] sm:$0xff]
      %v1249 = vld [vmem:[#allocation2 + $0xb8] sm:$0xff]
      %v1250 = vld [vmem:[#allocation2 + $0xc0] sm:$0xff]
      %v1251 = vld [vmem:[#allocation2 + $0xc8] sm:$0xff]
      %v1252 = vld [vmem:[#allocation2 + $0xd0] sm:$0xff]
      %v1253 = vld [vmem:[#allocation2 + $0xd8] sm:$0xff]
      %v1254 = vld [vmem:[#allocation2 + $0xe0] sm:$0xff]
      %v1255 = vld [vmem:[#allocation2 + $0xe8] sm:$0xff]
      %v1256 = vld [vmem:[#allocation2 + $0xf0] sm:$0xff]
      %v1257 = vld [vmem:[#allocation2 + $0xf8] sm:$0xff]
      %v1258 = vld [vmem:[#allocation2 + $0x100] sm:$0xff]
      %v1259 = vld [vmem:[#allocation2 + $0x108] sm:$0xff]
      %v1260 = vld [vmem:[#allocation2 + $0x110] sm:$0xff]
      %v1261 = vld [vmem:[#allocation2 + $0x118] sm:$0xff]
      %v1262 = vld [vmem:[#allocation2 + $0x120] sm:$0xff]
      %v1263 = vld [vmem:[#allocation2 + $0x128] sm:$0xff]
      %v1264 = vld [vmem:[#allocation2 + $0x130] sm:$0xff]
      %v1265 = vld [vmem:[#allocation2 + $0x138] sm:$0xff]
      %v1266 = vld [vmem:[#allocation2 + $0x140] sm:$0xff]
      %v1267 = vld [vmem:[#allocation2 + $0x148] sm:$0xff]
      %v1268 = vld [vmem:[#allocation2 + $0x150] sm:$0xff]
      %v1269 = vld [vmem:[#allocation2 + $0x158] sm:$0xff]
      %v1270 = vld [vmem:[#allocation2 + $0x160] sm:$0xff]
      %v1271 = vld [vmem:[#allocation2 + $0x168] sm:$0xff]
      %v1272 = vld [vmem:[#allocation2 + $0x170] sm:$0xff]
      %v1273 = vld [vmem:[#allocation2 + $0x178] sm:$0xff]
      %v1274 = vld [vmem:[#allocation2 + $0x180] sm:$0xff]
      %v1275 = vld [vmem:[#allocation2 + $0x188] sm:$0xff]
      %v1276 = vld [vmem:[#allocation2 + $0x190] sm:$0xff]
      %v1277 = vld [vmem:[#allocation2 + $0x198] sm:$0xff]
      %v1278 = vld [vmem:[#allocation2 + $0x1a0] sm:$0xff]
      %v1279 = vld [vmem:[#allocation2 + $0x1a8] sm:$0xff]
      %v1280 = vld [vmem:[#allocation2 + $0x1b0] sm:$0xff]
      %v1281 = vld [vmem:[#allocation2 + $0x1b8] sm:$0xff]
      %v1282 = vld [vmem:[#allocation2 + $0x1c0] sm:$0xff]
      %v1283 = vld [vmem:[#allocation2 + $0x1c8] sm:$0xff]
      %v1284 = vld [vmem:[#allocation2 + $0x1d0] sm:$0xff]
      %v1285 = vld [vmem:[#allocation2 + $0x1d8] sm:$0xff]
      %v1286 = vld [vmem:[#allocation2 + $0x1e0] sm:$0xff]
      %v1287 = vld [vmem:[#allocation2 + $0x1e8] sm:$0xff]
      %v1288 = vld [vmem:[#allocation2 + $0x1f0] sm:$0xff]
      %v1289 = vld [vmem:[#allocation2 + $0x1f8] sm:$0xff]
      %v1290 = vld [vmem:[#allocation2 + $0x200] sm:$0xff]
      %v1291 = vld [vmem:[#allocation2 + $0x208] sm:$0xff]
      %v1292 = vld [vmem:[#allocation2 + $0x210] sm:$0xff]
      %v1293 = vld [vmem:[#allocation2 + $0x218] sm:$0xff]
      %v1294 = vld [vmem:[#allocation2 + $0x220] sm:$0xff]
      %v1295 = vld [vmem:[#allocation2 + $0x228] sm:$0xff]
      %v1296 = vld [vmem:[#allocation2 + $0x230] sm:$0xff]
      %v1297 = vld [vmem:[#allocation2 + $0x238] sm:$0x3]
      %v1298 = vld [vmem:[%s2] sm:$0x1]
      %v1300 = vlaneseq
      %v1301 = vshrl.u32 %v1300, 7
      %v1302 = vsub.s32 0, %v1301
      %v1303 = vrot.slane %v1298, %v1302
      %v1305 = vadd.f32 %v1226, %v1303
      %v1306 = vadd.f32 %v1227, %v1303
      %v1307 = vadd.f32 %v1228, %v1303
      %v1308 = vadd.f32 %v1229, %v1303
      %v1309 = vadd.f32 %v1230, %v1303
      %v1310 = vadd.f32 %v1231, %v1303
      %v1311 = vadd.f32 %v1232, %v1303
      %v1312 = vadd.f32 %v1233, %v1303
      %v1313 = vadd.f32 %v1234, %v1303
      %v1314 = vadd.f32 %v1235, %v1303
      %v1315 = vadd.f32 %v1236, %v1303
      %v1316 = vadd.f32 %v1237, %v1303
      %v1317 = vadd.f32 %v1238, %v1303
      %v1318 = vadd.f32 %v1239, %v1303
      %v1319 = vadd.f32 %v1240, %v1303
      %v1320 = vadd.f32 %v1241, %v1303
      %v1321 = vadd.f32 %v1242, %v1303
      %v1322 = vadd.f32 %v1243, %v1303
      %v1323 = vadd.f32 %v1244, %v1303
      %v1324 = vadd.f32 %v1245, %v1303
      %v1325 = vadd.f32 %v1246, %v1303
      %v1326 = vadd.f32 %v1247, %v1303
      %v1327 = vadd.f32 %v1248, %v1303
      %v1328 = vadd.f32 %v1249, %v1303
      %v1329 = vadd.f32 %v1250, %v1303
      %v1330 = vadd.f32 %v1251, %v1303
      %v1331 = vadd.f32 %v1252, %v1303
      %v1332 = vadd.f32 %v1253, %v1303
      %v1333 = vadd.f32 %v1254, %v1303
      %v1334 = vadd.f32 %v1255, %v1303
      %v1335 = vadd.f32 %v1256, %v1303
      %v1336 = vadd.f32 %v1257, %v1303
      %v1337 = vadd.f32 %v1258, %v1303
      %v1338 = vadd.f32 %v1259, %v1303
      %v1339 = vadd.f32 %v1260, %v1303
      %v1340 = vadd.f32 %v1261, %v1303
      %v1341 = vadd.f32 %v1262, %v1303
      %v1342 = vadd.f32 %v1263, %v1303
      %v1343 = vadd.f32 %v1264, %v1303
      %v1344 = vadd.f32 %v1265, %v1303
      %v1345 = vadd.f32 %v1266, %v1303
      %v1346 = vadd.f32 %v1267, %v1303
      %v1347 = vadd.f32 %v1268, %v1303
      %v1348 = vadd.f32 %v1269, %v1303
      %v1349 = vadd.f32 %v1270, %v1303
      %v1350 = vadd.f32 %v1271, %v1303
      %v1351 = vadd.f32 %v1272, %v1303
      %v1352 = vadd.f32 %v1273, %v1303
      %v1353 = vadd.f32 %v1274, %v1303
      %v1354 = vadd.f32 %v1275, %v1303
      %v1355 = vadd.f32 %v1276, %v1303
      %v1356 = vadd.f32 %v1277, %v1303
      %v1357 = vadd.f32 %v1278, %v1303
      %v1358 = vadd.f32 %v1279, %v1303
      %v1359 = vadd.f32 %v1280, %v1303
      %v1360 = vadd.f32 %v1281, %v1303
      %v1361 = vadd.f32 %v1282, %v1303
      %v1362 = vadd.f32 %v1283, %v1303
      %v1363 = vadd.f32 %v1284, %v1303
      %v1364 = vadd.f32 %v1285, %v1303
      %v1365 = vadd.f32 %v1286, %v1303
      %v1366 = vadd.f32 %v1287, %v1303
      %v1367 = vadd.f32 %v1288, %v1303
      %v1368 = vadd.f32 %v1289, %v1303
      %v1369 = vadd.f32 %v1290, %v1303
      %v1370 = vadd.f32 %v1291, %v1303
      %v1371 = vadd.f32 %v1292, %v1303
      %v1372 = vadd.f32 %v1293, %v1303
      %v1373 = vadd.f32 %v1294, %v1303
      %v1374 = vadd.f32 %v1295, %v1303
      %v1375 = vadd.f32 %v1296, %v1303
      %v1376 = vadd.f32 %v1297, %v1303
      %v1377 = vadd.f32 %v1305, %v1306
      %v1378 = vadd.f32 %v1377, %v1307
      %v1379 = vadd.f32 %v1378, %v1308
      %v1380 = vadd.f32 %v1379, %v1309
      %v1381 = vadd.f32 %v1380, %v1310
      %v1382 = vadd.f32 %v1381, %v1311
      %v1383 = vadd.f32 %v1382, %v1312
      %v1384 = vadd.f32 %v1383, %v1313
      %v1385 = vadd.f32 %v1384, %v1314
      %v1386 = vadd.f32 %v1385, %v1315
      %v1387 = vadd.f32 %v1386, %v1316
      %v1388 = vadd.f32 %v1387, %v1317
      %v1389 = vadd.f32 %v1388, %v1318
      %v1390 = vadd.f32 %v1389, %v1319
      %v1391 = vadd.f32 %v1390, %v1320
      %v1392 = vadd.f32 %v1391, %v1321
      %v1393 = vadd.f32 %v1392, %v1322
      %v1394 = vadd.f32 %v1393, %v1323
      %v1395 = vadd.f32 %v1394, %v1324
      %v1396 = vadd.f32 %v1395, %v1325
      %v1397 = vadd.f32 %v1396, %v1326
      %v1398 = vadd.f32 %v1397, %v1327
      %v1399 = vadd.f32 %v1398, %v1328
      %v1400 = vadd.f32 %v1399, %v1329
      %v1401 = vadd.f32 %v1400, %v1330
      %v1402 = vadd.f32 %v1401, %v1331
      %v1403 = vadd.f32 %v1402, %v1332
      %v1404 = vadd.f32 %v1403, %v1333
      %v1405 = vadd.f32 %v1404, %v1334
      %v1406 = vadd.f32 %v1405, %v1335
      %v1407 = vadd.f32 %v1406, %v1336
      %v1408 = vadd.f32 %v1407, %v1337
      %v1409 = vadd.f32 %v1408, %v1338
      %v1410 = vadd.f32 %v1409, %v1339
      %v1411 = vadd.f32 %v1410, %v1340
      %v1412 = vadd.f32 %v1411, %v1341
      %v1413 = vadd.f32 %v1412, %v1342
      %v1414 = vadd.f32 %v1413, %v1343
      %v1415 = vadd.f32 %v1414, %v1344
      %v1416 = vadd.f32 %v1415, %v1345
      %v1417 = vadd.f32 %v1416, %v1346
      %v1418 = vadd.f32 %v1417, %v1347
      %v1419 = vadd.f32 %v1418, %v1348
      %v1420 = vadd.f32 %v1419, %v1349
      %v1421 = vadd.f32 %v1420, %v1350
      %v1422 = vadd.f32 %v1421, %v1351
      %v1423 = vadd.f32 %v1422, %v1352
      %v1424 = vadd.f32 %v1423, %v1353
      %v1425 = vadd.f32 %v1424, %v1354
      %v1426 = vadd.f32 %v1425, %v1355
      %v1427 = vadd.f32 %v1426, %v1356
      %v1428 = vadd.f32 %v1427, %v1357
      %v1429 = vadd.f32 %v1428, %v1358
      %v1430 = vadd.f32 %v1429, %v1359
      %v1431 = vadd.f32 %v1430, %v1360
      %v1432 = vadd.f32 %v1431, %v1361
      %v1433 = vadd.f32 %v1432, %v1362
      %v1434 = vadd.f32 %v1433, %v1363
      %v1435 = vadd.f32 %v1434, %v1364
      %v1436 = vadd.f32 %v1435, %v1365
      %v1437 = vadd.f32 %v1436, %v1366
      %v1438 = vadd.f32 %v1437, %v1367
      %v1439 = vadd.f32 %v1438, %v1368
      %v1440 = vadd.f32 %v1439, %v1369
      %v1441 = vadd.f32 %v1440, %v1370
      %v1442 = vadd.f32 %v1441, %v1371
      %v1443 = vadd.f32 %v1442, %v1372
      %v1444 = vadd.f32 %v1443, %v1373
      %v1445 = vadd.f32 %v1444, %v1374
      %v1446 = vadd.f32 %v1445, %v1375
      %v1447 = vsel %vm752, %v1376, 0.0
      %v1448 = vadd.f32 %v1446, %v1447
      %v1449 = vrot.slane %v1448, 4
      %v1450 = vadd.f32 %v1448, %v1449
      %v1451 = vrot.slane %v1450, 2
      %v1452 = vadd.f32 %v1450, %v1451
      %v1453 = vrot.slane %v1452, 1
      %v1454 = vadd.f32 %v1452, %v1453
      %v1455 = vrcp.pop 570.0
      %v1456 = vmul.f32 %v1454, %v1455
      %v1457 = vsub.f32 %v1305, %v1456
      %v1458 = vsub.f32 %v1306, %v1456
      %v1459 = vsub.f32 %v1307, %v1456
      %v1460 = vsub.f32 %v1308, %v1456
      %v1461 = vsub.f32 %v1309, %v1456
      %v1462 = vsub.f32 %v1310, %v1456
      %v1463 = vsub.f32 %v1311, %v1456
      %v1464 = vsub.f32 %v1312, %v1456
      %v1465 = vsub.f32 %v1313, %v1456
      %v1466 = vsub.f32 %v1314, %v1456
      %v1467 = vsub.f32 %v1315, %v1456
      %v1468 = vsub.f32 %v1316, %v1456
      %v1469 = vsub.f32 %v1317, %v1456
      %v1470 = vsub.f32 %v1318, %v1456
      %v1471 = vsub.f32 %v1319, %v1456
      %v1472 = vsub.f32 %v1320, %v1456
      %v1473 = vsub.f32 %v1321, %v1456
      %v1474 = vsub.f32 %v1322, %v1456
      %v1475 = vsub.f32 %v1323, %v1456
      %v1476 = vsub.f32 %v1324, %v1456
      %v1477 = vsub.f32 %v1325, %v1456
      %v1478 = vsub.f32 %v1326, %v1456
      %v1479 = vsub.f32 %v1327, %v1456
      %v1480 = vsub.f32 %v1328, %v1456
      %v1481 = vsub.f32 %v1329, %v1456
      %v1482 = vsub.f32 %v1330, %v1456
      %v1483 = vsub.f32 %v1331, %v1456
      %v1484 = vsub.f32 %v1332, %v1456
      %v1485 = vsub.f32 %v1333, %v1456
      %v1486 = vsub.f32 %v1334, %v1456
      %v1487 = vsub.f32 %v1335, %v1456
      %v1488 = vsub.f32 %v1336, %v1456
      %v1489 = vsub.f32 %v1337, %v1456
      %v1490 = vsub.f32 %v1338, %v1456
      %v1491 = vsub.f32 %v1339, %v1456
      %v1492 = vsub.f32 %v1340, %v1456
      %v1493 = vsub.f32 %v1341, %v1456
      %v1494 = vsub.f32 %v1342, %v1456
      %v1495 = vsub.f32 %v1343, %v1456
      %v1496 = vsub.f32 %v1344, %v1456
      %v1497 = vsub.f32 %v1345, %v1456
      %v1498 = vsub.f32 %v1346, %v1456
      %v1499 = vsub.f32 %v1347, %v1456
      %v1500 = vsub.f32 %v1348, %v1456
      %v1501 = vsub.f32 %v1349, %v1456
      %v1502 = vsub.f32 %v1350, %v1456
      %v1503 = vsub.f32 %v1351, %v1456
      %v1504 = vsub.f32 %v1352, %v1456
      %v1505 = vsub.f32 %v1353, %v1456
      %v1506 = vsub.f32 %v1354, %v1456
      %v1507 = vsub.f32 %v1355, %v1456
      %v1508 = vsub.f32 %v1356, %v1456
      %v1509 = vsub.f32 %v1357, %v1456
      %v1510 = vsub.f32 %v1358, %v1456
      %v1511 = vsub.f32 %v1359, %v1456
      %v1512 = vsub.f32 %v1360, %v1456
      %v1513 = vsub.f32 %v1361, %v1456
      %v1514 = vsub.f32 %v1362, %v1456
      %v1515 = vsub.f32 %v1363, %v1456
      %v1516 = vsub.f32 %v1364, %v1456
      %v1517 = vsub.f32 %v1365, %v1456
      %v1518 = vsub.f32 %v1366, %v1456
      %v1519 = vsub.f32 %v1367, %v1456
      %v1520 = vsub.f32 %v1368, %v1456
      %v1521 = vsub.f32 %v1369, %v1456
      %v1522 = vsub.f32 %v1370, %v1456
      %v1523 = vsub.f32 %v1371, %v1456
      %v1524 = vsub.f32 %v1372, %v1456
      %v1525 = vsub.f32 %v1373, %v1456
      %v1526 = vsub.f32 %v1374, %v1456
      %v1527 = vsub.f32 %v1375, %v1456
      %v1528 = vsub.f32 %v1376, %v1456
      %v1529 = vmul.f32 %v1457, %v1457
      %v1530 = vmul.f32 %v1458, %v1458
      %v1531 = vmul.f32 %v1459, %v1459
      %v1532 = vmul.f32 %v1460, %v1460
      %v1533 = vmul.f32 %v1461, %v1461
      %v1534 = vmul.f32 %v1462, %v1462
      %v1535 = vmul.f32 %v1463, %v1463
      %v1536 = vmul.f32 %v1464, %v1464
      %v1537 = vmul.f32 %v1465, %v1465
      %v1538 = vmul.f32 %v1466, %v1466
      %v1539 = vmul.f32 %v1467, %v1467
      %v1540 = vmul.f32 %v1468, %v1468
      %v1541 = vmul.f32 %v1469, %v1469
      %v1542 = vmul.f32 %v1470, %v1470
      %v1543 = vmul.f32 %v1471, %v1471
      %v1544 = vmul.f32 %v1472, %v1472
      %v1545 = vmul.f32 %v1473, %v1473
      %v1546 = vmul.f32 %v1474, %v1474
      %v1547 = vmul.f32 %v1475, %v1475
      %v1548 = vmul.f32 %v1476, %v1476
      %v1549 = vmul.f32 %v1477, %v1477
      %v1550 = vmul.f32 %v1478, %v1478
      %v1551 = vmul.f32 %v1479, %v1479
      %v1552 = vmul.f32 %v1480, %v1480
      %v1553 = vmul.f32 %v1481, %v1481
      %v1554 = vmul.f32 %v1482, %v1482
      %v1555 = vmul.f32 %v1483, %v1483
      %v1556 = vmul.f32 %v1484, %v1484
      %v1557 = vmul.f32 %v1485, %v1485
      %v1558 = vmul.f32 %v1486, %v1486
      %v1559 = vmul.f32 %v1487, %v1487
      %v1560 = vmul.f32 %v1488, %v1488
      %v1561 = vmul.f32 %v1489, %v1489
      %v1562 = vmul.f32 %v1490, %v1490
      %v1563 = vmul.f32 %v1491, %v1491
      %v1564 = vmul.f32 %v1492, %v1492
      %v1565 = vmul.f32 %v1493, %v1493
      %v1566 = vmul.f32 %v1494, %v1494
      %v1567 = vmul.f32 %v1495, %v1495
      %v1568 = vmul.f32 %v1496, %v1496
      %v1569 = vmul.f32 %v1497, %v1497
      %v1570 = vmul.f32 %v1498, %v1498
      %v1571 = vmul.f32 %v1499, %v1499
      %v1572 = vmul.f32 %v1500, %v1500
      %v1573 = vmul.f32 %v1501, %v1501
      %v1574 = vmul.f32 %v1502, %v1502
      %v1575 = vmul.f32 %v1503, %v1503
      %v1576 = vmul.f32 %v1504, %v1504
      %v1577 = vmul.f32 %v1505, %v1505
      %v1578 = vmul.f32 %v1506, %v1506
      %v1579 = vmul.f32 %v1507, %v1507
      %v1580 = vmul.f32 %v1508, %v1508
      %v1581 = vmul.f32 %v1509, %v1509
      %v1582 = vmul.f32 %v1510, %v1510
      %v1583 = vmul.f32 %v1511, %v1511
      %v1584 = vmul.f32 %v1512, %v1512
      %v1585 = vmul.f32 %v1513, %v1513
      %v1586 = vmul.f32 %v1514, %v1514
      %v1587 = vmul.f32 %v1515, %v1515
      %v1588 = vmul.f32 %v1516, %v1516
      %v1589 = vmul.f32 %v1517, %v1517
      %v1590 = vmul.f32 %v1518, %v1518
      %v1591 = vmul.f32 %v1519, %v1519
      %v1592 = vmul.f32 %v1520, %v1520
      %v1593 = vmul.f32 %v1521, %v1521
      %v1594 = vmul.f32 %v1522, %v1522
      %v1595 = vmul.f32 %v1523, %v1523
      %v1596 = vmul.f32 %v1524, %v1524
      %v1597 = vmul.f32 %v1525, %v1525
      %v1598 = vmul.f32 %v1526, %v1526
      %v1599 = vmul.f32 %v1527, %v1527
      %v1600 = vmul.f32 %v1528, %v1528
      %v1601 = vadd.f32 %v1529, %v1530
      %v1602 = vadd.f32 %v1601, %v1531
      %v1603 = vadd.f32 %v1602, %v1532
      %v1604 = vadd.f32 %v1603, %v1533
      %v1605 = vadd.f32 %v1604, %v1534
      %v1606 = vadd.f32 %v1605, %v1535
      %v1607 = vadd.f32 %v1606, %v1536
      %v1608 = vadd.f32 %v1607, %v1537
      %v1609 = vadd.f32 %v1608, %v1538
      %v1610 = vadd.f32 %v1609, %v1539
      %v1611 = vadd.f32 %v1610, %v1540
      %v1612 = vadd.f32 %v1611, %v1541
      %v1613 = vadd.f32 %v1612, %v1542
      %v1614 = vadd.f32 %v1613, %v1543
      %v1615 = vadd.f32 %v1614, %v1544
      %v1616 = vadd.f32 %v1615, %v1545
      %v1617 = vadd.f32 %v1616, %v1546
      %v1618 = vadd.f32 %v1617, %v1547
      %v1619 = vadd.f32 %v1618, %v1548
      %v1620 = vadd.f32 %v1619, %v1549
      %v1621 = vadd.f32 %v1620, %v1550
      %v1622 = vadd.f32 %v1621, %v1551
      %v1623 = vadd.f32 %v1622, %v1552
      %v1624 = vadd.f32 %v1623, %v1553
      %v1625 = vadd.f32 %v1624, %v1554
      %v1626 = vadd.f32 %v1625, %v1555
      %v1627 = vadd.f32 %v1626, %v1556
      %v1628 = vadd.f32 %v1627, %v1557
      %v1629 = vadd.f32 %v1628, %v1558
      %v1630 = vadd.f32 %v1629, %v1559
      %v1631 = vadd.f32 %v1630, %v1560
      %v1632 = vadd.f32 %v1631, %v1561
      %v1633 = vadd.f32 %v1632, %v1562
      %v1634 = vadd.f32 %v1633, %v1563
      %v1635 = vadd.f32 %v1634, %v1564
      %v1636 = vadd.f32 %v1635, %v1565
      %v1637 = vadd.f32 %v1636, %v1566
      %v1638 = vadd.f32 %v1637, %v1567
      %v1639 = vadd.f32 %v1638, %v1568
      %v1640 = vadd.f32 %v1639, %v1569
      %v1641 = vadd.f32 %v1640, %v1570
      %v1642 = vadd.f32 %v1641, %v1571
      %v1643 = vadd.f32 %v1642, %v1572
      %v1644 = vadd.f32 %v1643, %v1573
      %v1645 = vadd.f32 %v1644, %v1574
      %v1646 = vadd.f32 %v1645, %v1575
      %v1647 = vadd.f32 %v1646, %v1576
      %v1648 = vadd.f32 %v1647, %v1577
      %v1649 = vadd.f32 %v1648, %v1578
      %v1650 = vadd.f32 %v1649, %v1579
      %v1651 = vadd.f32 %v1650, %v1580
      %v1652 = vadd.f32 %v1651, %v1581
      %v1653 = vadd.f32 %v1652, %v1582
      %v1654 = vadd.f32 %v1653, %v1583
      %v1655 = vadd.f32 %v1654, %v1584
      %v1656 = vadd.f32 %v1655, %v1585
      %v1657 = vadd.f32 %v1656, %v1586
      %v1658 = vadd.f32 %v1657, %v1587
      %v1659 = vadd.f32 %v1658, %v1588
      %v1660 = vadd.f32 %v1659, %v1589
      %v1661 = vadd.f32 %v1660, %v1590
      %v1662 = vadd.f32 %v1661, %v1591
      %v1663 = vadd.f32 %v1662, %v1592
      %v1664 = vadd.f32 %v1663, %v1593
      %v1665 = vadd.f32 %v1664, %v1594
      %v1666 = vadd.f32 %v1665, %v1595
      %v1667 = vadd.f32 %v1666, %v1596
      %v1668 = vadd.f32 %v1667, %v1597
      %v1669 = vadd.f32 %v1668, %v1598
      %v1670 = vadd.f32 %v1669, %v1599
      %v1671 = vsel %vm752, %v1600, 0.0
      %v1672 = vadd.f32 %v1670, %v1671
      %v1673 = vrot.slane %v1672, 4
      %v1674 = vadd.f32 %v1672, %v1673
      %v1675 = vrot.slane %v1674, 2
      %v1676 = vadd.f32 %v1674, %v1675
      %v1677 = vrot.slane %v1676, 1
      %v1678 = vadd.f32 %v1676, %v1677
      %v1679 = vmul.f32 %v1678, %v1455
      %v1680 = vadd.f32 %v1679, 1e-05
      %v1681 = vrsqrt.pop %v1680
      %v1682 = vmul.f32 %v1457, %v1681
      %v1683 = vmul.f32 %v1458, %v1681
      %v1684 = vmul.f32 %v1459, %v1681
      %v1685 = vmul.f32 %v1460, %v1681
      %v1686 = vmul.f32 %v1461, %v1681
      %v1687 = vmul.f32 %v1462, %v1681
      %v1688 = vmul.f32 %v1463, %v1681
      %v1689 = vmul.f32 %v1464, %v1681
      %v1690 = vmul.f32 %v1465, %v1681
      %v1691 = vmul.f32 %v1466, %v1681
      %v1692 = vmul.f32 %v1467, %v1681
      %v1693 = vmul.f32 %v1468, %v1681
      %v1694 = vmul.f32 %v1469, %v1681
      %v1695 = vmul.f32 %v1470, %v1681
      %v1696 = vmul.f32 %v1471, %v1681
      %v1697 = vmul.f32 %v1472, %v1681
      %v1698 = vmul.f32 %v1473, %v1681
      %v1699 = vmul.f32 %v1474, %v1681
      %v1700 = vmul.f32 %v1475, %v1681
      %v1701 = vmul.f32 %v1476, %v1681
      %v1702 = vmul.f32 %v1477, %v1681
      %v1703 = vmul.f32 %v1478, %v1681
      %v1704 = vmul.f32 %v1479, %v1681
      %v1705 = vmul.f32 %v1480, %v1681
      %v1706 = vmul.f32 %v1481, %v1681
      %v1707 = vmul.f32 %v1482, %v1681
      %v1708 = vmul.f32 %v1483, %v1681
      %v1709 = vmul.f32 %v1484, %v1681
      %v1710 = vmul.f32 %v1485, %v1681
      %v1711 = vmul.f32 %v1486, %v1681
      %v1712 = vmul.f32 %v1487, %v1681
      %v1713 = vmul.f32 %v1488, %v1681
      %v1714 = vmul.f32 %v1489, %v1681
      %v1715 = vmul.f32 %v1490, %v1681
      %v1716 = vmul.f32 %v1491, %v1681
      %v1717 = vmul.f32 %v1492, %v1681
      %v1718 = vmul.f32 %v1493, %v1681
      %v1719 = vmul.f32 %v1494, %v1681
      %v1720 = vmul.f32 %v1495, %v1681
      %v1721 = vmul.f32 %v1496, %v1681
      %v1722 = vmul.f32 %v1497, %v1681
      %v1723 = vmul.f32 %v1498, %v1681
      %v1724 = vmul.f32 %v1499, %v1681
      %v1725 = vmul.f32 %v1500, %v1681
      %v1726 = vmul.f32 %v1501, %v1681
      %v1727 = vmul.f32 %v1502, %v1681
      %v1728 = vmul.f32 %v1503, %v1681
      %v1729 = vmul.f32 %v1504, %v1681
      %v1730 = vmul.f32 %v1505, %v1681
      %v1731 = vmul.f32 %v1506, %v1681
      %v1732 = vmul.f32 %v1507, %v1681
      %v1733 = vmul.f32 %v1508, %v1681
      %v1734 = vmul.f32 %v1509, %v1681
      %v1735 = vmul.f32 %v1510, %v1681
      %v1736 = vmul.f32 %v1511, %v1681
      %v1737 = vmul.f32 %v1512, %v1681
      %v1738 = vmul.f32 %v1513, %v1681
      %v1739 = vmul.f32 %v1514, %v1681
      %v1740 = vmul.f32 %v1515, %v1681
      %v1741 = vmul.f32 %v1516, %v1681
      %v1742 = vmul.f32 %v1517, %v1681
      %v1743 = vmul.f32 %v1518, %v1681
      %v1744 = vmul.f32 %v1519, %v1681
      %v1745 = vmul.f32 %v1520, %v1681
      %v1746 = vmul.f32 %v1521, %v1681
      %v1747 = vmul.f32 %v1522, %v1681
      %v1748 = vmul.f32 %v1523, %v1681
      %v1749 = vmul.f32 %v1524, %v1681
      %v1750 = vmul.f32 %v1525, %v1681
      %v1751 = vmul.f32 %v1526, %v1681
      %v1752 = vmul.f32 %v1527, %v1681
      %v1753 = vmul.f32 %v1528, %v1681
      %v1754 = vld [vmem:[%s3] sm:$0x1]
      %v1756 = vlaneseq
      %v1757 = vshrl.u32 %v1756, 7
      %v1758 = vsub.s32 0, %v1757
      %v1759 = vrot.slane %v1754, %v1758
      %v1761 = vmul.f32 %v1759, %v1682
      %v1762 = vmul.f32 %v1759, %v1683
      %v1763 = vmul.f32 %v1759, %v1684
      %v1764 = vmul.f32 %v1759, %v1685
      %v1765 = vmul.f32 %v1759, %v1686
      %v1766 = vmul.f32 %v1759, %v1687
      %v1767 = vmul.f32 %v1759, %v1688
      %v1768 = vmul.f32 %v1759, %v1689
      %v1769 = vmul.f32 %v1759, %v1690
      %v1770 = vmul.f32 %v1759, %v1691
      %v1771 = vmul.f32 %v1759, %v1692
      %v1772 = vmul.f32 %v1759, %v1693
      %v1773 = vmul.f32 %v1759, %v1694
      %v1774 = vmul.f32 %v1759, %v1695
      %v1775 = vmul.f32 %v1759, %v1696
      %v1776 = vmul.f32 %v1759, %v1697
      %v1777 = vmul.f32 %v1759, %v1698
      %v1778 = vmul.f32 %v1759, %v1699
      %v1779 = vmul.f32 %v1759, %v1700
      %v1780 = vmul.f32 %v1759, %v1701
      %v1781 = vmul.f32 %v1759, %v1702
      %v1782 = vmul.f32 %v1759, %v1703
      %v1783 = vmul.f32 %v1759, %v1704
      %v1784 = vmul.f32 %v1759, %v1705
      %v1785 = vmul.f32 %v1759, %v1706
      %v1786 = vmul.f32 %v1759, %v1707
      %v1787 = vmul.f32 %v1759, %v1708
      %v1788 = vmul.f32 %v1759, %v1709
      %v1789 = vmul.f32 %v1759, %v1710
      %v1790 = vmul.f32 %v1759, %v1711
      %v1791 = vmul.f32 %v1759, %v1712
      %v1792 = vmul.f32 %v1759, %v1713
      %v1793 = vmul.f32 %v1759, %v1714
      %v1794 = vmul.f32 %v1759, %v1715
      %v1795 = vmul.f32 %v1759, %v1716
      %v1796 = vmul.f32 %v1759, %v1717
      %v1797 = vmul.f32 %v1759, %v1718
      %v1798 = vmul.f32 %v1759, %v1719
      %v1799 = vmul.f32 %v1759, %v1720
      %v1800 = vmul.f32 %v1759, %v1721
      %v1801 = vmul.f32 %v1759, %v1722
      %v1802 = vmul.f32 %v1759, %v1723
      %v1803 = vmul.f32 %v1759, %v1724
      %v1804 = vmul.f32 %v1759, %v1725
      %v1805 = vmul.f32 %v1759, %v1726
      %v1806 = vmul.f32 %v1759, %v1727
      %v1807 = vmul.f32 %v1759, %v1728
      %v1808 = vmul.f32 %v1759, %v1729
      %v1809 = vmul.f32 %v1759, %v1730
      %v1810 = vmul.f32 %v1759, %v1731
      %v1811 = vmul.f32 %v1759, %v1732
      %v1812 = vmul.f32 %v1759, %v1733
      %v1813 = vmul.f32 %v1759, %v1734
      %v1814 = vmul.f32 %v1759, %v1735
      %v1815 = vmul.f32 %v1759, %v1736
      %v1816 = vmul.f32 %v1759, %v1737
      %v1817 = vmul.f32 %v1759, %v1738
      %v1818 = vmul.f32 %v1759, %v1739
      %v1819 = vmul.f32 %v1759, %v1740
      %v1820 = vmul.f32 %v1759, %v1741
      %v1821 = vmul.f32 %v1759, %v1742
      %v1822 = vmul.f32 %v1759, %v1743
      %v1823 = vmul.f32 %v1759, %v1744
      %v1824 = vmul.f32 %v1759, %v1745
      %v1825 = vmul.f32 %v1759, %v1746
      %v1826 = vmul.f32 %v1759, %v1747
      %v1827 = vmul.f32 %v1759, %v1748
      %v1828 = vmul.f32 %v1759, %v1749
      %v1829 = vmul.f32 %v1759, %v1750
      %v1830 = vmul.f32 %v1759, %v1751
      %v1831 = vmul.f32 %v1759, %v1752
      %v1832 = vmul.f32 %v1759, %v1753
      %v1833 = vld [vmem:[%s4] sm:$0x1]
      %v1835 = vlaneseq
      %v1836 = vshrl.u32 %v1835, 7
      %v1837 = vsub.s32 0, %v1836
      %v1838 = vrot.slane %v1833, %v1837
      %v1840 = vadd.f32 %v1761, %v1838
      %v1841 = vadd.f32 %v1762, %v1838
      %v1842 = vadd.f32 %v1763, %v1838
      %v1843 = vadd.f32 %v1764, %v1838
      %v1844 = vadd.f32 %v1765, %v1838
      %v1845 = vadd.f32 %v1766, %v1838
      %v1846 = vadd.f32 %v1767, %v1838
      %v1847 = vadd.f32 %v1768, %v1838
      %v1848 = vadd.f32 %v1769, %v1838
      %v1849 = vadd.f32 %v1770, %v1838
      %v1850 = vadd.f32 %v1771, %v1838
      %v1851 = vadd.f32 %v1772, %v1838
      %v1852 = vadd.f32 %v1773, %v1838
      %v1853 = vadd.f32 %v1774, %v1838
      %v1854 = vadd.f32 %v1775, %v1838
      %v1855 = vadd.f32 %v1776, %v1838
      %v1856 = vadd.f32 %v1777, %v1838
      %v1857 = vadd.f32 %v1778, %v1838
      %v1858 = vadd.f32 %v1779, %v1838
      %v1859 = vadd.f32 %v1780, %v1838
      %v1860 = vadd.f32 %v1781, %v1838
      %v1861 = vadd.f32 %v1782, %v1838
      %v1862 = vadd.f32 %v1783, %v1838
      %v1863 = vadd.f32 %v1784, %v1838
      %v1864 = vadd.f32 %v1785, %v1838
      %v1865 = vadd.f32 %v1786, %v1838
      %v1866 = vadd.f32 %v1787, %v1838
      %v1867 = vadd.f32 %v1788, %v1838
      %v1868 = vadd.f32 %v1789, %v1838
      %v1869 = vadd.f32 %v1790, %v1838
      %v1870 = vadd.f32 %v1791, %v1838
      %v1871 = vadd.f32 %v1792, %v1838
      %v1872 = vadd.f32 %v1793, %v1838
      %v1873 = vadd.f32 %v1794, %v1838
      %v1874 = vadd.f32 %v1795, %v1838
      %v1875 = vadd.f32 %v1796, %v1838
      %v1876 = vadd.f32 %v1797, %v1838
      %v1877 = vadd.f32 %v1798, %v1838
      %v1878 = vadd.f32 %v1799, %v1838
      %v1879 = vadd.f32 %v1800, %v1838
      %v1880 = vadd.f32 %v1801, %v1838
      %v1881 = vadd.f32 %v1802, %v1838
      %v1882 = vadd.f32 %v1803, %v1838
      %v1883 = vadd.f32 %v1804, %v1838
      %v1884 = vadd.f32 %v1805, %v1838
      %v1885 = vadd.f32 %v1806, %v1838
      %v1886 = vadd.f32 %v1807, %v1838
      %v1887 = vadd.f32 %v1808, %v1838
      %v1888 = vadd.f32 %v1809, %v1838
      %v1889 = vadd.f32 %v1810, %v1838
      %v1890 = vadd.f32 %v1811, %v1838
      %v1891 = vadd.f32 %v1812, %v1838
      %v1892 = vadd.f32 %v1813, %v1838
      %v1893 = vadd.f32 %v1814, %v1838
      %v1894 = vadd.f32 %v1815, %v1838
      %v1895 = vadd.f32 %v1816, %v1838
      %v1896 = vadd.f32 %v1817, %v1838
      %v1897 = vadd.f32 %v1818, %v1838
      %v1898 = vadd.f32 %v1819, %v1838
      %v1899 = vadd.f32 %v1820, %v1838
      %v1900 = vadd.f32 %v1821, %v1838
      %v1901 = vadd.f32 %v1822, %v1838
      %v1902 = vadd.f32 %v1823, %v1838
      %v1903 = vadd.f32 %v1824, %v1838
      %v1904 = vadd.f32 %v1825, %v1838
      %v1905 = vadd.f32 %v1826, %v1838
      %v1906 = vadd.f32 %v1827, %v1838
      %v1907 = vadd.f32 %v1828, %v1838
      %v1908 = vadd.f32 %v1829, %v1838
      %v1909 = vadd.f32 %v1830, %v1838
      %v1910 = vadd.f32 %v1831, %v1838
      %v1911 = vadd.f32 %v1832, %v1838
      %v1912 = vmax.f32 %v1840, 0.0
      %v1913 = vmax.f32 %v1841, 0.0
      %v1914 = vmax.f32 %v1842, 0.0
      %v1915 = vmax.f32 %v1843, 0.0
      %v1916 = vmax.f32 %v1844, 0.0
      %v1917 = vmax.f32 %v1845, 0.0
      %v1918 = vmax.f32 %v1846, 0.0
      %v1919 = vmax.f32 %v1847, 0.0
      %v1920 = vmax.f32 %v1848, 0.0
      %v1921 = vmax.f32 %v1849, 0.0
      %v1922 = vmax.f32 %v1850, 0.0
      %v1923 = vmax.f32 %v1851, 0.0
      %v1924 = vmax.f32 %v1852, 0.0
      %v1925 = vmax.f32 %v1853, 0.0
      %v1926 = vmax.f32 %v1854, 0.0
      %v1927 = vmax.f32 %v1855, 0.0
      %v1928 = vmax.f32 %v1856, 0.0
      %v1929 = vmax.f32 %v1857, 0.0
      %v1930 = vmax.f32 %v1858, 0.0
      %v1931 = vmax.f32 %v1859, 0.0
      %v1932 = vmax.f32 %v1860, 0.0
      %v1933 = vmax.f32 %v1861, 0.0
      %v1934 = vmax.f32 %v1862, 0.0
      %v1935 = vmax.f32 %v1863, 0.0
      %v1936 = vmax.f32 %v1864, 0.0
      %v1937 = vmax.f32 %v1865, 0.0
      %v1938 = vmax.f32 %v1866, 0.0
      %v1939 = vmax.f32 %v1867, 0.0
      %v1940 = vmax.f32 %v1868, 0.0
      %v1941 = vmax.f32 %v1869, 0.0
      %v1942 = vmax.f32 %v1870, 0.0
      %v1943 = vmax.f32 %v1871, 0.0
      %v1944 = vmax.f32 %v1872, 0.0
      %v1945 = vmax.f32 %v1873, 0.0
      %v1946 = vmax.f32 %v1874, 0.0
      %v1947 = vmax.f32 %v1875, 0.0
      %v1948 = vmax.f32 %v1876, 0.0
      %v1949 = vmax.f32 %v1877, 0.0
      %v1950 = vmax.f32 %v1878, 0.0
      %v1951 = vmax.f32 %v1879, 0.0
      %v1952 = vmax.f32 %v1880, 0.0
      %v1953 = vmax.f32 %v1881, 0.0
      %v1954 = vmax.f32 %v1882, 0.0
      %v1955 = vmax.f32 %v1883, 0.0
      %v1956 = vmax.f32 %v1884, 0.0
      %v1957 = vmax.f32 %v1885, 0.0
      %v1958 = vmax.f32 %v1886, 0.0
      %v1959 = vmax.f32 %v1887, 0.0
      %v1960 = vmax.f32 %v1888, 0.0
      %v1961 = vmax.f32 %v1889, 0.0
      %v1962 = vmax.f32 %v1890, 0.0
      %v1963 = vmax.f32 %v1891, 0.0
      %v1964 = vmax.f32 %v1892, 0.0
      %v1965 = vmax.f32 %v1893, 0.0
      %v1966 = vmax.f32 %v1894, 0.0
      %v1967 = vmax.f32 %v1895, 0.0
      %v1968 = vmax.f32 %v1896, 0.0
      %v1969 = vmax.f32 %v1897, 0.0
      %v1970 = vmax.f32 %v1898, 0.0
      %v1971 = vmax.f32 %v1899, 0.0
      %v1972 = vmax.f32 %v1900, 0.0
      %v1973 = vmax.f32 %v1901, 0.0
      %v1974 = vmax.f32 %v1902, 0.0
      %v1975 = vmax.f32 %v1903, 0.0
      %v1976 = vmax.f32 %v1904, 0.0
      %v1977 = vmax.f32 %v1905, 0.0
      %v1978 = vmax.f32 %v1906, 0.0
      %v1979 = vmax.f32 %v1907, 0.0
      %v1980 = vmax.f32 %v1908, 0.0
      %v1981 = vmax.f32 %v1909, 0.0
      %v1982 = vmax.f32 %v1910, 0.0
      %v1983 = vmax.f32 %v1911, 0.0
      %1984 = vst [vmem:[#allocation2] sm:$0xff] %v1912
      %1985 = vst [vmem:[#allocation2 + $0x8] sm:$0xff] %v1913
      %1986 = vst [vmem:[#allocation2 + $0x10] sm:$0xff] %v1914
      %1987 = vst [vmem:[#allocation2 + $0x18] sm:$0xff] %v1915
      %1988 = vst [vmem:[#allocation2 + $0x20] sm:$0xff] %v1916
      %1989 = vst [vmem:[#allocation2 + $0x28] sm:$0xff] %v1917
      %1990 = vst [vmem:[#allocation2 + $0x30] sm:$0xff] %v1918
      %1991 = vst [vmem:[#allocation2 + $0x38] sm:$0xff] %v1919
      %1992 = vst [vmem:[#allocation2 + $0x40] sm:$0xff] %v1920
      %1993 = vst [vmem:[#allocation2 + $0x48] sm:$0xff] %v1921
      %1994 = vst [vmem:[#allocation2 + $0x50] sm:$0xff] %v1922
      %1995 = vst [vmem:[#allocation2 + $0x58] sm:$0xff] %v1923
      %1996 = vst [vmem:[#allocation2 + $0x60] sm:$0xff] %v1924
      %1997 = vst [vmem:[#allocation2 + $0x68] sm:$0xff] %v1925
      %1998 = vst [vmem:[#allocation2 + $0x70] sm:$0xff] %v1926
      %1999 = vst [vmem:[#allocation2 + $0x78] sm:$0xff] %v1927
      %2000 = vst [vmem:[#allocation2 + $0x80] sm:$0xff] %v1928
      %2001 = vst [vmem:[#allocation2 + $0x88] sm:$0xff] %v1929
      %2002 = vst [vmem:[#allocation2 + $0x90] sm:$0xff] %v1930
      %2003 = vst [vmem:[#allocation2 + $0x98] sm:$0xff] %v1931
      %2004 = vst [vmem:[#allocation2 + $0xa0] sm:$0xff] %v1932
      %2005 = vst [vmem:[#allocation2 + $0xa8] sm:$0xff] %v1933
      %2006 = vst [vmem:[#allocation2 + $0xb0] sm:$0xff] %v1934
      %2007 = vst [vmem:[#allocation2 + $0xb8] sm:$0xff] %v1935
      %2008 = vst [vmem:[#allocation2 + $0xc0] sm:$0xff] %v1936
      %2009 = vst [vmem:[#allocation2 + $0xc8] sm:$0xff] %v1937
      %2010 = vst [vmem:[#allocation2 + $0xd0] sm:$0xff] %v1938
      %2011 = vst [vmem:[#allocation2 + $0xd8] sm:$0xff] %v1939
      %2012 = vst [vmem:[#allocation2 + $0xe0] sm:$0xff] %v1940
      %2013 = vst [vmem:[#allocation2 + $0xe8] sm:$0xff] %v1941
      %2014 = vst [vmem:[#allocation2 + $0xf0] sm:$0xff] %v1942
      %2015 = vst [vmem:[#allocation2 + $0xf8] sm:$0xff] %v1943
      %2016 = vst [vmem:[#allocation2 + $0x100] sm:$0xff] %v1944
      %2017 = vst [vmem:[#allocation2 + $0x108] sm:$0xff] %v1945
      %2018 = vst [vmem:[#allocation2 + $0x110] sm:$0xff] %v1946
      %2019 = vst [vmem:[#allocation2 + $0x118] sm:$0xff] %v1947
      %2020 = vst [vmem:[#allocation2 + $0x120] sm:$0xff] %v1948
      %2021 = vst [vmem:[#allocation2 + $0x128] sm:$0xff] %v1949
      %2022 = vst [vmem:[#allocation2 + $0x130] sm:$0xff] %v1950
      %2023 = vst [vmem:[#allocation2 + $0x138] sm:$0xff] %v1951
      %2024 = vst [vmem:[#allocation2 + $0x140] sm:$0xff] %v1952
      %2025 = vst [vmem:[#allocation2 + $0x148] sm:$0xff] %v1953
      %2026 = vst [vmem:[#allocation2 + $0x150] sm:$0xff] %v1954
      %2027 = vst [vmem:[#allocation2 + $0x158] sm:$0xff] %v1955
      %2028 = vst [vmem:[#allocation2 + $0x160] sm:$0xff] %v1956
      %2029 = vst [vmem:[#allocation2 + $0x168] sm:$0xff] %v1957
      %2030 = vst [vmem:[#allocation2 + $0x170] sm:$0xff] %v1958
      %2031 = vst [vmem:[#allocation2 + $0x178] sm:$0xff] %v1959
      %2032 = vst [vmem:[#allocation2 + $0x180] sm:$0xff] %v1960
      %2033 = vst [vmem:[#allocation2 + $0x188] sm:$0xff] %v1961
      %2034 = vst [vmem:[#allocation2 + $0x190] sm:$0xff] %v1962
      %2035 = vst [vmem:[#allocation2 + $0x198] sm:$0xff] %v1963
      %2036 = vst [vmem:[#allocation2 + $0x1a0] sm:$0xff] %v1964
      %2037 = vst [vmem:[#allocation2 + $0x1a8] sm:$0xff] %v1965
      %2038 = vst [vmem:[#allocation2 + $0x1b0] sm:$0xff] %v1966
      %2039 = vst [vmem:[#allocation2 + $0x1b8] sm:$0xff] %v1967
      %2040 = vst [vmem:[#allocation2 + $0x1c0] sm:$0xff] %v1968
      %2041 = vst [vmem:[#allocation2 + $0x1c8] sm:$0xff] %v1969
      %2042 = vst [vmem:[#allocation2 + $0x1d0] sm:$0xff] %v1970
      %2043 = vst [vmem:[#allocation2 + $0x1d8] sm:$0xff] %v1971
      %2044 = vst [vmem:[#allocation2 + $0x1e0] sm:$0xff] %v1972
      %2045 = vst [vmem:[#allocation2 + $0x1e8] sm:$0xff] %v1973
      %2046 = vst [vmem:[#allocation2 + $0x1f0] sm:$0xff] %v1974
      %2047 = vst [vmem:[#allocation2 + $0x1f8] sm:$0xff] %v1975
      %2048 = vst [vmem:[#allocation2 + $0x200] sm:$0xff] %v1976
      %2049 = vst [vmem:[#allocation2 + $0x208] sm:$0xff] %v1977
      %2050 = vst [vmem:[#allocation2 + $0x210] sm:$0xff] %v1978
      %2051 = vst [vmem:[#allocation2 + $0x218] sm:$0xff] %v1979
      %2052 = vst [vmem:[#allocation2 + $0x220] sm:$0xff] %v1980
      %2053 = vst [vmem:[#allocation2 + $0x228] sm:$0xff] %v1981
      %2054 = vst [vmem:[#allocation2 + $0x230] sm:$0xff] %v1982
      %2055 = vst [vmem:[#allocation2 + $0x238] sm:$0x3] %v1983
    $region29: #{tpu_custom_call.1} parent=1 // pred_fallthru
      _
    // Predicated region
    $region30: #{tpu_custom_call.1} parent=1 // pred_check
      _
    $region31: #{tpu_custom_call.1} parent=1 // pred_check_branch
      %2057 = sbr.rel (0) target = $region33
    $region32: #{tpu_custom_call.1} parent=1 // pred_region
      %s2059 = ssub.s32 9216, 9216
      %2060 = vsyncadd [#allocation3], %s2059
      %s2061 = sshll.u32 [#allocation2], 4
      %s2062 = int_to_ptr.vmem [resolvable:$true] %s2061
      %2067 = dma.vmem_to_hbm [thread:$0]  %s2062, 9216, %s5, [#allocation3], 128, 128, 8
    $region33: #{tpu_custom_call.1} parent=1 // pred_fallthru
      _
    // Predicated region
    $region34: #{tpu_custom_call.1} parent=1 // pred_check
      _
    $region35: #{tpu_custom_call.1} parent=1 // pred_check_branch
      %2069 = sbr.rel (0) target = $region37
    $region36: #{tpu_custom_call.1} parent=1 // pred_region
      %2070 = dma.done [#allocation3], 9216
    $region37: #{tpu_custom_call.1} parent=1 // pred_fallthru
      _
    %2071 = vsyncpa [#allocation3], 1

</llo_original>
